<compile_context>
chip_gen: v7x
topology: tpu7x:2x2x1
jax: 0.10.0
libtpu: 0.0.40
codegen_flags: <defaults>
</compile_context>

<pallas_src>
import functools

import jax
import jax.numpy as jnp
import numpy as np
from jax.experimental import pallas as pl
from jax.experimental.pallas import tpu as pltpu


# ----------------------------------------------------------------------------
# Fused kernel: conv trunk + profile/count heads for one batch element.
# ----------------------------------------------------------------------------
def _fused_kernel(*refs, layer_meta, nb_conv):
    # refs layout:
    #   x_ref,
    #   (w_r_ref (Cout, K*Cin), bias_ref (Cout, 1)) * nb_conv,
    #   wp_ref (L_final, P*O), bp_ref (1, P*O), wct_ref (Cout, P), bc_ref (1, P),
    #   xo_ref (1, Cout, L_final), prof_ref (1, 1, P*O), cnt_ref (1, 1, P)
    x_ref = refs[0]
    w_refs = refs[1:1 + 2 * nb_conv]
    wp_ref, bp_ref, wct_ref, bc_ref = refs[1 + 2 * nb_conv:5 + 2 * nb_conv]
    xo_ref, prof_ref, cnt_ref = refs[5 + 2 * nb_conv:]

    x = x_ref[0]                                     # (Cin, L_in) f32, lanes = L
    for i, (K, d) in enumerate(layer_meta):          # static unroll over layers
        w_r = w_refs[2 * i][...]                     # (Cout, K*Cin)
        bias = w_refs[2 * i + 1][...]                # (Cout, 1)
        l_out = x.shape[1] - (K - 1) * d
        # im2col: K shifted lane-windows stacked along sublanes -> one matmul.
        cols = [x[:, k * d:k * d + l_out] for k in range(K)]
        im2col = jnp.concatenate(cols, axis=0).astype(jnp.bfloat16)
        y = jnp.dot(w_r.astype(jnp.bfloat16), im2col,
                    preferred_element_type=jnp.float32)      # (Cout, l_out)
        y = jnp.maximum(y + bias, 0.0)               # bias + ReLU (f32 epilogue)
        if i > 0:                                    # residual skip, cropped by d
            y = y + x[:, d:d + l_out]
        x = y

    xo_ref[0] = x                                    # (Cout, L_final), lane-dense

    # ---- heads (pooling computed once; P*O = lane-dense output) ----
    ch_mean = jnp.mean(x, axis=0, keepdims=True)     # (1, L_final) pool over C
    prof = jnp.dot(ch_mean.astype(jnp.bfloat16),
                   wp_ref[...].astype(jnp.bfloat16),
                   preferred_element_type=jnp.float32) + bp_ref[...]  # (1, P*O)
    prof_ref[0] = prof

    len_mean = jnp.mean(x, axis=1, keepdims=True)    # (Cout, 1) pool over L
    cnt = jnp.sum(wct_ref[...] * len_mean, axis=0, keepdims=True) + bc_ref[...]
    cnt_ref[0] = cnt                                 # (1, P)


# ----------------------------------------------------------------------------
# Public forward: weight re-layout at trace time, one pallas_call.
# ----------------------------------------------------------------------------
def catac_forward(x_ncl, params):
    """x_ncl: (B, 11, L) float32 (PyTorch NCL).  Returns
    (x_out (B, C, L_final), pred_profiles (B, out_pred_len, nb_pred),
     pred_counts (B, nb_pred))."""
    conv_w, conv_b = list(params["conv_w"]), list(params["conv_b"])
    B, cin, L_in = x_ncl.shape
    nb_conv = len(conv_w)

    # Pad input channels (11) up to a multiple of 8 so every sublane offset in
    # the in-kernel im2col concat is aligned; zero rows contribute nothing.
    cin_pad = -(-cin // 8) * 8
    if cin_pad != cin:
        x_in = jnp.pad(x_ncl, ((0, 0), (0, cin_pad - cin), (0, 0)))
        conv_w[0] = jnp.pad(conv_w[0], ((0, 0), (0, cin_pad - cin), (0, 0)))
    else:
        x_in = x_ncl

    # Trace-time weight re-layout: (K, Cin, Cout) -> (Cout, K*Cin), bias (Cout,1).
    layer_meta, w_inputs, w_specs = [], [], []
    L = L_in
    for i, (w, b) in enumerate(zip(conv_w, conv_b)):
        K, Ci, Co = w.shape
        d = 1 if i == 0 else 2 ** i
        layer_meta.append((K, d))
        L = L - (K - 1) * d
        w_inputs += [jnp.transpose(w, (2, 0, 1)).reshape(Co, K * Ci),
                     b.reshape(Co, 1)]
        w_specs += [pl.BlockSpec((Co, K * Ci), lambda bidx: (0, 0)),
                    pl.BlockSpec((Co, 1), lambda bidx: (0, 0))]
    L_final = L
    Cout = conv_w[-1].shape[2]

    wp, bp, wc, bc = params["wp"], params["bp"], params["wc"], params["bc"]
    P, _, O = wp.shape
    wp_r = jnp.transpose(wp, (1, 0, 2)).reshape(L_final, P * O)  # (L, P*O)
    bp_r = bp.reshape(1, P * O)
    wct = wc.T                                                   # (Cout, P)
    bc_r = bc.reshape(1, P)

    head_specs = [pl.BlockSpec((L_final, P * O), lambda bidx: (0, 0)),
                  pl.BlockSpec((1, P * O), lambda bidx: (0, 0)),
                  pl.BlockSpec((Cout, P), lambda bidx: (0, 0)),
                  pl.BlockSpec((1, P), lambda bidx: (0, 0))]

    kernel = functools.partial(_fused_kernel, layer_meta=tuple(layer_meta),
                               nb_conv=nb_conv)

    x_out, prof_flat, cnt_flat = pl.pallas_call(
        kernel,
        out_shape=(jax.ShapeDtypeStruct((B, Cout, L_final), jnp.float32),
                   jax.ShapeDtypeStruct((B, 1, P * O), jnp.float32),
                   jax.ShapeDtypeStruct((B, 1, P), jnp.float32)),
        grid=(B,),
        in_specs=[pl.BlockSpec((1, cin_pad, L_in), lambda bidx: (bidx, 0, 0))]
                 + w_specs + head_specs,
        out_specs=(pl.BlockSpec((1, Cout, L_final), lambda bidx: (bidx, 0, 0)),
                   pl.BlockSpec((1, 1, P * O), lambda bidx: (bidx, 0, 0)),
                   pl.BlockSpec((1, 1, P), lambda bidx: (bidx, 0, 0))),
        compiler_params=pltpu.CompilerParams(
            dimension_semantics=("parallel",)),  # batch axis -> both TCs on v7x
    )(x_in, *w_inputs, wp_r, bp_r, wct, bc_r)

    pred_profiles = prof_flat.reshape(B, P, O).transpose(0, 2, 1)  # (B, O, P)
    pred_counts = cnt_flat.reshape(B, P)
    return x_out, pred_profiles, pred_counts


# ----------------------------------------------------------------------------
# Pure-JAX reference (PyTorch semantics; matmul operands in bf16 with f32
# accumulation to match the kernel's documented precision choice).
# ----------------------------------------------------------------------------
def ref_forward(x_ncl, params):
    f32 = jnp.float32
    x = x_ncl                                           # (B, Cin, L) NCL
    for i, (w, b) in enumerate(zip(params["conv_w"], params["conv_b"])):
        d = 1 if i == 0 else 2 ** i
        K = w.shape[0]
        L_out = x.shape[2] - (K - 1) * d
        acc = jnp.zeros((x.shape[0], w.shape[2], L_out), f32)
        for k in range(K):
            xs = x[:, :, k * d:k * d + L_out]
            acc = acc + jnp.einsum("co,bcl->bol", w[k].astype(jnp.bfloat16),
                                   xs.astype(jnp.bfloat16),
                                   preferred_element_type=f32)
        acc = jnp.maximum(acc + b[None, :, None], 0.0)
        if i > 0:
            acc = acc + x[:, :, d:d + L_out]
        x = acc
    ch_mean = x.mean(axis=1)                            # (B, L)
    len_mean = x.mean(axis=2)                           # (B, C)
    prof = (jnp.einsum("bl,plo->bop", ch_mean.astype(jnp.bfloat16),
                       params["wp"].astype(jnp.bfloat16),
                       preferred_element_type=f32)
            + jnp.transpose(params["bp"], (1, 2, 0)))
    cnt = (jnp.einsum("bc,pc->bp", len_mean, params["wc"],
                      precision=jax.lax.Precision.HIGHEST)
           + params["bc"][:, 0][None, :])
    return x, prof, cnt


def make_params(key, *, nb_conv, nb_filters, first_kernel, rest_kernel,
                size_final_conv, out_pred_len, nb_pred, in_channels=11):
    keys = jax.random.split(key, 4 * nb_conv + 8)
    ki = iter(range(len(keys)))
    conv_w, conv_b = [], []
    conv_w.append(0.05 * jax.random.normal(
        keys[next(ki)], (first_kernel, in_channels, nb_filters), jnp.float32))
    conv_b.append(0.01 * jax.random.normal(
        keys[next(ki)], (nb_filters,), jnp.float32))
    for _ in range(1, nb_conv):
        conv_w.append(0.05 * jax.random.normal(
            keys[next(ki)], (rest_kernel, nb_filters, nb_filters), jnp.float32))
        conv_b.append(0.01 * jax.random.normal(
            keys[next(ki)], (nb_filters,), jnp.float32))
    wp = 0.05 * jax.random.normal(
        keys[next(ki)], (nb_pred, size_final_conv, out_pred_len), jnp.float32)
    bp = 0.01 * jax.random.normal(
        keys[next(ki)], (nb_pred, 1, out_pred_len), jnp.float32)
    wc = 0.05 * jax.random.normal(
        keys[next(ki)], (nb_pred, nb_filters), jnp.float32)
    bc = 0.01 * jax.random.normal(keys[next(ki)], (nb_pred, 1), jnp.float32)
    return {"conv_w": conv_w, "conv_b": conv_b,
            "wp": wp, "bp": bp, "wc": wc, "bc": bc}


if __name__ == "__main__":
    # small config: 160 bp input -> 128 after 4 conv layers (k=5,3,3,3; dil 1,2,4,8)
    B, IN_C, L = 2, 11, 160
    NB_CONV, NB_FILTERS = 4, 32
    FIRST_K, REST_K = 5, 3
    OUT_PRED_LEN, NB_PRED = 64, 4
    SIZE_FINAL = L - (FIRST_K - 1) - sum(2 * (2 ** i) for i in range(1, NB_CONV))

    key = jax.random.PRNGKey(0)
    k_x, k_p = jax.random.split(key)
    x = jax.random.normal(k_x, (B, IN_C, L), jnp.float32)
    params = make_params(k_p, nb_conv=NB_CONV, nb_filters=NB_FILTERS,
                         first_kernel=FIRST_K, rest_kernel=REST_K,
                         size_final_conv=SIZE_FINAL, out_pred_len=OUT_PRED_LEN,
                         nb_pred=NB_PRED, in_channels=IN_C)

    fwd = jax.jit(catac_forward)
    x_out, pred_profiles, pred_counts = jax.block_until_ready(fwd(x, params))

    assert x_out.shape == (B, NB_FILTERS, SIZE_FINAL)
    assert pred_profiles.shape == (B, OUT_PRED_LEN, NB_PRED)
    assert pred_counts.shape == (B, NB_PRED)

    # correctness check vs. pure-JAX reference (same bf16/f32 precision contract)
    rx, rp, rc = jax.block_until_ready(ref_forward(x, params))
    np.testing.assert_allclose(np.asarray(x_out), np.asarray(rx),
                               rtol=1e-2, atol=1e-2)
    np.testing.assert_allclose(np.asarray(pred_profiles), np.asarray(rp),
                               rtol=1e-2, atol=1e-2)
    np.testing.assert_allclose(np.asarray(pred_counts), np.asarray(rc),
                               rtol=1e-2, atol=1e-2)

    print("KERNEL_OK")
</pallas_src>

<mosaic_0001>
module attributes {stable_mosaic.version = 11 : i64} {
  func.func @_fused_kernel(%arg0: i32, %arg1: memref<1x16x160xf32, #tpu.memory_space<vmem>>, %arg2: memref<32x80xf32, #tpu.memory_space<vmem>>, %arg3: memref<32x1xf32, #tpu.memory_space<vmem>>, %arg4: memref<32x96xf32, #tpu.memory_space<vmem>>, %arg5: memref<32x1xf32, #tpu.memory_space<vmem>>, %arg6: memref<32x96xf32, #tpu.memory_space<vmem>>, %arg7: memref<32x1xf32, #tpu.memory_space<vmem>>, %arg8: memref<32x96xf32, #tpu.memory_space<vmem>>, %arg9: memref<32x1xf32, #tpu.memory_space<vmem>>, %arg10: memref<128x256xf32, #tpu.memory_space<vmem>>, %arg11: memref<1x256xf32, #tpu.memory_space<vmem>>, %arg12: memref<32x4xf32, #tpu.memory_space<vmem>>, %arg13: memref<1x4xf32, #tpu.memory_space<vmem>>, %arg14: memref<1x32x128xf32, #tpu.memory_space<vmem>>, %arg15: memref<1x1x256xf32, #tpu.memory_space<vmem>>, %arg16: memref<1x1x4xf32, #tpu.memory_space<vmem>>) attributes {dimension_semantics = [#tpu.dimension_semantics<parallel>], iteration_bounds = array<i64: 2>, scalar_prefetch = 0 : i64, scratch_operands = 0 : i64, tpu.core_type = #tpu.core_type<tc>, window_params = [{transform_indices = @transform_0, window_bounds = array<i64: 1, 16, 160>}, {pipeline_mode = #tpu.pipeline_mode<synchronous>, transform_indices = @transform_1, window_bounds = array<i64: 32, 80>}, {pipeline_mode = #tpu.pipeline_mode<synchronous>, transform_indices = @transform_2, window_bounds = array<i64: 32, 1>}, {pipeline_mode = #tpu.pipeline_mode<synchronous>, transform_indices = @transform_3, window_bounds = array<i64: 32, 96>}, {pipeline_mode = #tpu.pipeline_mode<synchronous>, transform_indices = @transform_4, window_bounds = array<i64: 32, 1>}, {pipeline_mode = #tpu.pipeline_mode<synchronous>, transform_indices = @transform_5, window_bounds = array<i64: 32, 96>}, {pipeline_mode = #tpu.pipeline_mode<synchronous>, transform_indices = @transform_6, window_bounds = array<i64: 32, 1>}, {pipeline_mode = #tpu.pipeline_mode<synchronous>, transform_indices = @transform_7, window_bounds = array<i64: 32, 96>}, {pipeline_mode = #tpu.pipeline_mode<synchronous>, transform_indices = @transform_8, window_bounds = array<i64: 32, 1>}, {pipeline_mode = #tpu.pipeline_mode<synchronous>, transform_indices = @transform_9, window_bounds = array<i64: 128, 256>}, {pipeline_mode = #tpu.pipeline_mode<synchronous>, transform_indices = @transform_10, window_bounds = array<i64: 1, 256>}, {pipeline_mode = #tpu.pipeline_mode<synchronous>, transform_indices = @transform_11, window_bounds = array<i64: 32, 4>}, {pipeline_mode = #tpu.pipeline_mode<synchronous>, transform_indices = @transform_12, window_bounds = array<i64: 1, 4>}, {transform_indices = @transform_13, window_bounds = array<i64: 1, 32, 128>}, {transform_indices = @transform_14, window_bounds = array<i64: 1, 1, 256>}, {transform_indices = @transform_15, window_bounds = array<i64: 1, 1, 4>}]} {
    %c0 = arith.constant 0 : index
    %c0_0 = arith.constant 0 : index
    %c0_1 = arith.constant 0 : index
    %0 = vector.load %arg1[%c0, %c0_0, %c0_1] : memref<1x16x160xf32, #tpu.memory_space<vmem>>, vector<1x16x160xf32>
    %1 = vector.shape_cast %0 : vector<1x16x160xf32> to vector<16x160xf32>
    %c0_2 = arith.constant 0 : index
    %c0_3 = arith.constant 0 : index
    %2 = vector.load %arg2[%c0_2, %c0_3] : memref<32x80xf32, #tpu.memory_space<vmem>>, vector<32x80xf32>
    %c0_4 = arith.constant 0 : index
    %c0_5 = arith.constant 0 : index
    %3 = vector.load %arg3[%c0_4, %c0_5] : memref<32x1xf32, #tpu.memory_space<vmem>>, vector<32x1xf32>
    %4 = vector.extract_strided_slice %1 {offsets = [0, 0], sizes = [16, 156], strides = [1, 1]} : vector<16x160xf32> to vector<16x156xf32>
    %5 = vector.extract_strided_slice %1 {offsets = [0, 1], sizes = [16, 156], strides = [1, 1]} : vector<16x160xf32> to vector<16x156xf32>
    %6 = vector.extract_strided_slice %1 {offsets = [0, 2], sizes = [16, 156], strides = [1, 1]} : vector<16x160xf32> to vector<16x156xf32>
    %7 = vector.extract_strided_slice %1 {offsets = [0, 3], sizes = [16, 156], strides = [1, 1]} : vector<16x160xf32> to vector<16x156xf32>
    %8 = vector.extract_strided_slice %1 {offsets = [0, 4], sizes = [16, 156], strides = [1, 1]} : vector<16x160xf32> to vector<16x156xf32>
    %9 = tpu.concatenate %4, %5, %6, %7, %8 in 0 : vector<16x156xf32>, vector<16x156xf32>, vector<16x156xf32>, vector<16x156xf32>, vector<16x156xf32> -> vector<80x156xf32>
    %10 = arith.truncf %9 : vector<80x156xf32> to vector<80x156xbf16>
    %11 = arith.truncf %2 : vector<32x80xf32> to vector<32x80xbf16>
    %cst = arith.constant dense<0.000000e+00> : vector<32x156xf32>
    %12 = tpu.matmul %11, %10, %cst {dimension_numbers = #tpu.dot_dimension_numbers<[1], [0], [0], [1], [0, 0, 1, 1], [], []>} : vector<32x80xbf16>, vector<80x156xbf16>, vector<32x156xf32> -> vector<32x156xf32>
    %13 = vector.broadcast %3 : vector<32x1xf32> to vector<32x156xf32>
    %14 = arith.addf %12, %13 : vector<32x156xf32>
    %cst_6 = arith.constant 0.000000e+00 : f32
    %15 = vector.broadcast %cst_6 : f32 to vector<32x156xf32>
    %16 = arith.maximumf %14, %15 : vector<32x156xf32>
    %c0_7 = arith.constant 0 : index
    %c0_8 = arith.constant 0 : index
    %17 = vector.load %arg4[%c0_7, %c0_8] : memref<32x96xf32, #tpu.memory_space<vmem>>, vector<32x96xf32>
    %c0_9 = arith.constant 0 : index
    %c0_10 = arith.constant 0 : index
    %18 = vector.load %arg5[%c0_9, %c0_10] : memref<32x1xf32, #tpu.memory_space<vmem>>, vector<32x1xf32>
    %19 = vector.extract_strided_slice %16 {offsets = [0, 0], sizes = [32, 152], strides = [1, 1]} : vector<32x156xf32> to vector<32x152xf32>
    %20 = vector.extract_strided_slice %16 {offsets = [0, 2], sizes = [32, 152], strides = [1, 1]} : vector<32x156xf32> to vector<32x152xf32>
    %21 = vector.extract_strided_slice %16 {offsets = [0, 4], sizes = [32, 152], strides = [1, 1]} : vector<32x156xf32> to vector<32x152xf32>
    %22 = tpu.concatenate %19, %20, %21 in 0 : vector<32x152xf32>, vector<32x152xf32>, vector<32x152xf32> -> vector<96x152xf32>
    %23 = arith.truncf %22 : vector<96x152xf32> to vector<96x152xbf16>
    %24 = arith.truncf %17 : vector<32x96xf32> to vector<32x96xbf16>
    %cst_11 = arith.constant dense<0.000000e+00> : vector<32x152xf32>
    %25 = tpu.matmul %24, %23, %cst_11 {dimension_numbers = #tpu.dot_dimension_numbers<[1], [0], [0], [1], [0, 0, 1, 1], [], []>} : vector<32x96xbf16>, vector<96x152xbf16>, vector<32x152xf32> -> vector<32x152xf32>
    %26 = vector.broadcast %18 : vector<32x1xf32> to vector<32x152xf32>
    %27 = arith.addf %25, %26 : vector<32x152xf32>
    %cst_12 = arith.constant 0.000000e+00 : f32
    %28 = vector.broadcast %cst_12 : f32 to vector<32x152xf32>
    %29 = arith.maximumf %27, %28 : vector<32x152xf32>
    %30 = vector.extract_strided_slice %16 {offsets = [0, 2], sizes = [32, 152], strides = [1, 1]} : vector<32x156xf32> to vector<32x152xf32>
    %31 = arith.addf %29, %30 : vector<32x152xf32>
    %c0_13 = arith.constant 0 : index
    %c0_14 = arith.constant 0 : index
    %32 = vector.load %arg6[%c0_13, %c0_14] : memref<32x96xf32, #tpu.memory_space<vmem>>, vector<32x96xf32>
    %c0_15 = arith.constant 0 : index
    %c0_16 = arith.constant 0 : index
    %33 = vector.load %arg7[%c0_15, %c0_16] : memref<32x1xf32, #tpu.memory_space<vmem>>, vector<32x1xf32>
    %34 = vector.extract_strided_slice %31 {offsets = [0, 0], sizes = [32, 144], strides = [1, 1]} : vector<32x152xf32> to vector<32x144xf32>
    %35 = vector.extract_strided_slice %31 {offsets = [0, 4], sizes = [32, 144], strides = [1, 1]} : vector<32x152xf32> to vector<32x144xf32>
    %36 = vector.extract_strided_slice %31 {offsets = [0, 8], sizes = [32, 144], strides = [1, 1]} : vector<32x152xf32> to vector<32x144xf32>
    %37 = tpu.concatenate %34, %35, %36 in 0 : vector<32x144xf32>, vector<32x144xf32>, vector<32x144xf32> -> vector<96x144xf32>
    %38 = arith.truncf %37 : vector<96x144xf32> to vector<96x144xbf16>
    %39 = arith.truncf %32 : vector<32x96xf32> to vector<32x96xbf16>
    %cst_17 = arith.constant dense<0.000000e+00> : vector<32x144xf32>
    %40 = tpu.matmul %39, %38, %cst_17 {dimension_numbers = #tpu.dot_dimension_numbers<[1], [0], [0], [1], [0, 0, 1, 1], [], []>} : vector<32x96xbf16>, vector<96x144xbf16>, vector<32x144xf32> -> vector<32x144xf32>
    %41 = vector.broadcast %33 : vector<32x1xf32> to vector<32x144xf32>
    %42 = arith.addf %40, %41 : vector<32x144xf32>
    %cst_18 = arith.constant 0.000000e+00 : f32
    %43 = vector.broadcast %cst_18 : f32 to vector<32x144xf32>
    %44 = arith.maximumf %42, %43 : vector<32x144xf32>
    %45 = vector.extract_strided_slice %31 {offsets = [0, 4], sizes = [32, 144], strides = [1, 1]} : vector<32x152xf32> to vector<32x144xf32>
    %46 = arith.addf %44, %45 : vector<32x144xf32>
    %c0_19 = arith.constant 0 : index
    %c0_20 = arith.constant 0 : index
    %47 = vector.load %arg8[%c0_19, %c0_20] : memref<32x96xf32, #tpu.memory_space<vmem>>, vector<32x96xf32>
    %c0_21 = arith.constant 0 : index
    %c0_22 = arith.constant 0 : index
    %48 = vector.load %arg9[%c0_21, %c0_22] : memref<32x1xf32, #tpu.memory_space<vmem>>, vector<32x1xf32>
    %49 = vector.extract_strided_slice %46 {offsets = [0, 0], sizes = [32, 128], strides = [1, 1]} : vector<32x144xf32> to vector<32x128xf32>
    %50 = vector.extract_strided_slice %46 {offsets = [0, 8], sizes = [32, 128], strides = [1, 1]} : vector<32x144xf32> to vector<32x128xf32>
    %51 = vector.extract_strided_slice %46 {offsets = [0, 16], sizes = [32, 128], strides = [1, 1]} : vector<32x144xf32> to vector<32x128xf32>
    %52 = tpu.concatenate %49, %50, %51 in 0 : vector<32x128xf32>, vector<32x128xf32>, vector<32x128xf32> -> vector<96x128xf32>
    %53 = arith.truncf %52 : vector<96x128xf32> to vector<96x128xbf16>
    %54 = arith.truncf %47 : vector<32x96xf32> to vector<32x96xbf16>
    %cst_23 = arith.constant dense<0.000000e+00> : vector<32x128xf32>
    %55 = tpu.matmul %54, %53, %cst_23 {dimension_numbers = #tpu.dot_dimension_numbers<[1], [0], [0], [1], [0, 0, 1, 1], [], []>} : vector<32x96xbf16>, vector<96x128xbf16>, vector<32x128xf32> -> vector<32x128xf32>
    %56 = vector.broadcast %48 : vector<32x1xf32> to vector<32x128xf32>
    %57 = arith.addf %55, %56 : vector<32x128xf32>
    %cst_24 = arith.constant 0.000000e+00 : f32
    %58 = vector.broadcast %cst_24 : f32 to vector<32x128xf32>
    %59 = arith.maximumf %57, %58 : vector<32x128xf32>
    %60 = vector.extract_strided_slice %46 {offsets = [0, 8], sizes = [32, 128], strides = [1, 1]} : vector<32x144xf32> to vector<32x128xf32>
    %61 = arith.addf %59, %60 : vector<32x128xf32>
    %c0_25 = arith.constant 0 : index
    %c0_26 = arith.constant 0 : index
    %c0_27 = arith.constant 0 : index
    %62 = vector.load %arg14[%c0_25, %c0_26, %c0_27] : memref<1x32x128xf32, #tpu.memory_space<vmem>>, vector<1x32x128xf32>
    %63 = vector.shape_cast %62 : vector<1x32x128xf32> to vector<32x128xf32>
    %64 = vector.shape_cast %61 : vector<32x128xf32> to vector<1x32x128xf32>
    tpu.vector_store %arg14[%c0_25, %c0_26, %c0_27], %64 {strides = array<i32>} : memref<1x32x128xf32, #tpu.memory_space<vmem>>, vector<1x32x128xf32>,
    %cst_28 = arith.constant dense<0.000000e+00> : vector<128xf32>
    %65 = vector.multi_reduction <add>, %61, %cst_28 [0] : vector<32x128xf32> to vector<128xf32>
    %66 = vector.shape_cast %65 : vector<128xf32> to vector<1x128xf32>
    %cst_29 = arith.constant 3.200000e+01 : f32
    %67 = vector.broadcast %cst_29 : f32 to vector<1x128xf32>
    %68 = arith.divf %66, %67 : vector<1x128xf32>
    %69 = arith.truncf %68 : vector<1x128xf32> to vector<1x128xbf16>
    %c0_30 = arith.constant 0 : index
    %c0_31 = arith.constant 0 : index
    %70 = vector.load %arg10[%c0_30, %c0_31] : memref<128x256xf32, #tpu.memory_space<vmem>>, vector<128x256xf32>
    %71 = arith.truncf %70 : vector<128x256xf32> to vector<128x256xbf16>
    %cst_32 = arith.constant dense<0.000000e+00> : vector<1x256xf32>
    %72 = tpu.matmul %69, %71, %cst_32 {dimension_numbers = #tpu.dot_dimension_numbers<[1], [0], [0], [1], [0, 0, 1, 1], [], []>} : vector<1x128xbf16>, vector<128x256xbf16>, vector<1x256xf32> -> vector<1x256xf32>
    %c0_33 = arith.constant 0 : index
    %c0_34 = arith.constant 0 : index
    %73 = vector.load %arg11[%c0_33, %c0_34] : memref<1x256xf32, #tpu.memory_space<vmem>>, vector<1x256xf32>
    %74 = arith.addf %72, %73 : vector<1x256xf32>
    %c0_35 = arith.constant 0 : index
    %c0_36 = arith.constant 0 : index
    %c0_37 = arith.constant 0 : index
    %75 = vector.load %arg15[%c0_35, %c0_36, %c0_37] : memref<1x1x256xf32, #tpu.memory_space<vmem>>, vector<1x1x256xf32>
    %76 = vector.shape_cast %75 : vector<1x1x256xf32> to vector<1x256xf32>
    %77 = vector.shape_cast %74 : vector<1x256xf32> to vector<1x1x256xf32>
    tpu.vector_store %arg15[%c0_35, %c0_36, %c0_37], %77 {strides = array<i32>} : memref<1x1x256xf32, #tpu.memory_space<vmem>>, vector<1x1x256xf32>,
    %cst_38 = arith.constant dense<0.000000e+00> : vector<32xf32>
    %78 = vector.multi_reduction <add>, %61, %cst_38 [1] : vector<32x128xf32> to vector<32xf32>
    %79 = vector.shape_cast %78 : vector<32xf32> to vector<32x1xf32>
    %cst_39 = arith.constant 1.280000e+02 : f32
    %80 = vector.broadcast %cst_39 : f32 to vector<32x1xf32>
    %81 = arith.divf %79, %80 : vector<32x1xf32>
    %c0_40 = arith.constant 0 : index
    %c0_41 = arith.constant 0 : index
    %82 = vector.load %arg12[%c0_40, %c0_41] : memref<32x4xf32, #tpu.memory_space<vmem>>, vector<32x4xf32>
    %83 = vector.broadcast %81 : vector<32x1xf32> to vector<32x4xf32>
    %84 = arith.mulf %82, %83 : vector<32x4xf32>
    %cst_42 = arith.constant dense<0.000000e+00> : vector<4xf32>
    %85 = vector.multi_reduction <add>, %84, %cst_42 [0] : vector<32x4xf32> to vector<4xf32>
    %86 = vector.shape_cast %85 : vector<4xf32> to vector<1x4xf32>
    %c0_43 = arith.constant 0 : index
    %c0_44 = arith.constant 0 : index
    %87 = vector.load %arg13[%c0_43, %c0_44] : memref<1x4xf32, #tpu.memory_space<vmem>>, vector<1x4xf32>
    %88 = arith.addf %86, %87 : vector<1x4xf32>
    %c0_45 = arith.constant 0 : index
    %c0_46 = arith.constant 0 : index
    %c0_47 = arith.constant 0 : index
    %89 = vector.load %arg16[%c0_45, %c0_46, %c0_47] : memref<1x1x4xf32, #tpu.memory_space<vmem>>, vector<1x1x4xf32>
    %90 = vector.shape_cast %89 : vector<1x1x4xf32> to vector<1x4xf32>
    %91 = vector.shape_cast %88 : vector<1x4xf32> to vector<1x1x4xf32>
    tpu.vector_store %arg16[%c0_45, %c0_46, %c0_47], %91 {strides = array<i32>} : memref<1x1x4xf32, #tpu.memory_space<vmem>>, vector<1x1x4xf32>,
    return
  }
  func.func @transform_0(%arg0: i32) -> (i32, i32, i32) {
    %c0_i32 = arith.constant 0 : i32
    %c0_i32_0 = arith.constant 0 : i32
    %c0_i32_1 = arith.constant 0 : i32
    return %arg0, %c0_i32, %c0_i32_0 : i32, i32, i32
  }
  func.func @transform_1(%arg0: i32) -> (i32, i32) {
    %c0_i32 = arith.constant 0 : i32
    %c0_i32_0 = arith.constant 0 : i32
    %c0_i32_1 = arith.constant 0 : i32
    return %c0_i32, %c0_i32_0 : i32, i32
  }
  func.func @transform_2(%arg0: i32) -> (i32, i32) {
    %c0_i32 = arith.constant 0 : i32
    %c0_i32_0 = arith.constant 0 : i32
    %c0_i32_1 = arith.constant 0 : i32
    return %c0_i32, %c0_i32_0 : i32, i32
  }
  func.func @transform_3(%arg0: i32) -> (i32, i32) {
    %c0_i32 = arith.constant 0 : i32
    %c0_i32_0 = arith.constant 0 : i32
    %c0_i32_1 = arith.constant 0 : i32
    return %c0_i32, %c0_i32_0 : i32, i32
  }
  func.func @transform_4(%arg0: i32) -> (i32, i32) {
    %c0_i32 = arith.constant 0 : i32
    %c0_i32_0 = arith.constant 0 : i32
    %c0_i32_1 = arith.constant 0 : i32
    return %c0_i32, %c0_i32_0 : i32, i32
  }
  func.func @transform_5(%arg0: i32) -> (i32, i32) {
    %c0_i32 = arith.constant 0 : i32
    %c0_i32_0 = arith.constant 0 : i32
    %c0_i32_1 = arith.constant 0 : i32
    return %c0_i32, %c0_i32_0 : i32, i32
  }
  func.func @transform_6(%arg0: i32) -> (i32, i32) {
    %c0_i32 = arith.constant 0 : i32
    %c0_i32_0 = arith.constant 0 : i32
    %c0_i32_1 = arith.constant 0 : i32
    return %c0_i32, %c0_i32_0 : i32, i32
  }
  func.func @transform_7(%arg0: i32) -> (i32, i32) {
    %c0_i32 = arith.constant 0 : i32
    %c0_i32_0 = arith.constant 0 : i32
    %c0_i32_1 = arith.constant 0 : i32
    return %c0_i32, %c0_i32_0 : i32, i32
  }
  func.func @transform_8(%arg0: i32) -> (i32, i32) {
    %c0_i32 = arith.constant 0 : i32
    %c0_i32_0 = arith.constant 0 : i32
    %c0_i32_1 = arith.constant 0 : i32
    return %c0_i32, %c0_i32_0 : i32, i32
  }
  func.func @transform_9(%arg0: i32) -> (i32, i32) {
    %c0_i32 = arith.constant 0 : i32
    %c0_i32_0 = arith.constant 0 : i32
    %c0_i32_1 = arith.constant 0 : i32
    return %c0_i32, %c0_i32_0 : i32, i32
  }
  func.func @transform_10(%arg0: i32) -> (i32, i32) {
    %c0_i32 = arith.constant 0 : i32
    %c0_i32_0 = arith.constant 0 : i32
    %c0_i32_1 = arith.constant 0 : i32
    return %c0_i32, %c0_i32_0 : i32, i32
  }
  func.func @transform_11(%arg0: i32) -> (i32, i32) {
    %c0_i32 = arith.constant 0 : i32
    %c0_i32_0 = arith.constant 0 : i32
    %c0_i32_1 = arith.constant 0 : i32
    return %c0_i32, %c0_i32_0 : i32, i32
  }
  func.func @transform_12(%arg0: i32) -> (i32, i32) {
    %c0_i32 = arith.constant 0 : i32
    %c0_i32_0 = arith.constant 0 : i32
    %c0_i32_1 = arith.constant 0 : i32
    return %c0_i32, %c0_i32_0 : i32, i32
  }
  func.func @transform_13(%arg0: i32) -> (i32, i32, i32) {
    %c0_i32 = arith.constant 0 : i32
    %c0_i32_0 = arith.constant 0 : i32
    %c0_i32_1 = arith.constant 0 : i32
    return %arg0, %c0_i32, %c0_i32_0 : i32, i32, i32
  }
  func.func @transform_14(%arg0: i32) -> (i32, i32, i32) {
    %c0_i32 = arith.constant 0 : i32
    %c0_i32_0 = arith.constant 0 : i32
    %c0_i32_1 = arith.constant 0 : i32
    return %arg0, %c0_i32, %c0_i32_0 : i32, i32, i32
  }
  func.func @transform_15(%arg0: i32) -> (i32, i32, i32) {
    %c0_i32 = arith.constant 0 : i32
    %c0_i32_0 = arith.constant 0 : i32
    %c0_i32_1 = arith.constant 0 : i32
    return %arg0, %c0_i32, %c0_i32_0 : i32, i32, i32
  }
}

</mosaic_0001>

<llo_original>
// kernel: catac_forward.1
$region0: #{catac_forward.1}
  #allocation0 [shape = 'u32[]', space=smem, size = 0x4, offset = 0x4, fixed_abs, tag = 'smem constant byte address 0x4 - core index']
  #allocation1 [shape = 'u32[144,128]{1,0:T(1,128)}', space=vmem, size = 0x12000, scoped, tag = 'internal scratch']
  %s0 = inlined_call_operand.vmem [shape: f32[2,16,160], index: 0, kind: input, shape index: {}]
  %s1 = inlined_call_operand.vmem [shape: f32[32,80], index: 1, kind: input, shape index: {}]
  %s2 = inlined_call_operand.vmem [shape: f32[32,1], index: 2, kind: input, shape index: {}]
  %s3 = inlined_call_operand.vmem [shape: f32[32,96], index: 3, kind: input, shape index: {}]
  %s4 = inlined_call_operand.vmem [shape: f32[32,1], index: 4, kind: input, shape index: {}]
  %s5 = inlined_call_operand.vmem [shape: f32[32,96], index: 5, kind: input, shape index: {}]
  %s6 = inlined_call_operand.vmem [shape: f32[32,1], index: 6, kind: input, shape index: {}]
  %s7 = inlined_call_operand.vmem [shape: f32[32,96], index: 7, kind: input, shape index: {}]
  %s8 = inlined_call_operand.vmem [shape: f32[32,1], index: 8, kind: input, shape index: {}]
  %s9 = inlined_call_operand.vmem [shape: f32[128,256], index: 9, kind: input, shape index: {}]
  %s10 = inlined_call_operand.vmem [shape: f32[1,256], index: 10, kind: input, shape index: {}]
  %s11 = inlined_call_operand.vmem [shape: f32[32,4], index: 11, kind: input, shape index: {}]
  %s12 = inlined_call_operand.vmem [shape: f32[1,4], index: 12, kind: input, shape index: {}]
  %s13 = inlined_call_operand.hbm [shape: f32[2,32,128], index: 13, kind: output, shape index: {0}]
  %s14 = inlined_call_operand.vmem [shape: f32[2,1,256], index: 14, kind: output, shape index: {1}]
  %s15 = inlined_call_operand.hbm [shape: f32[2,1,4], index: 15, kind: output, shape index: {2}]
  %16 = xla_tuple %s13, %s14, %s15
  %s17 = sld [smem:[#allocation0]]
  $region101: #{catac_forward.1} parent=0
    _
  %s19 = ssub.s32 1, %s17
  %s20 = scalar_select 0, %s19, %s17
  $region1: #{catac_forward.1} parent=0
    #allocation2 [shape = 'u8[32768]{0}', space=vmem, size = 0x8000, scoped, tag = 'output window, operand 0']
    #allocation3 [shape = 's32[2]{0}', space=sflag, size = 0x8, scoped, tag = 'scoped memory for catac_forward.1']
    #allocation4 [shape = 'u8[1024]{0}', space=vmem, size = 0x400, scoped, tag = 'output window, operand 2']
    #allocation5 [shape = 's32[2]{0}', space=sflag, size = 0x8, scoped, tag = 'scoped memory for catac_forward.1']
    %21 = vsyncpa [#allocation3], 0
    %s22 = scalar_lea.sflag [#allocation3], 1
    %23 = vsyncpa %s22, 0
    %24 = vsyncpa [#allocation5], 0
    %s25 = scalar_lea.sflag [#allocation5], 1
    %26 = vsyncpa %s25, 0
    loop: start=0, step=1, limit=4
    $region2: #{catac_forward.1} parent=1 // loop_pre_header
      _
    $region3: #{catac_forward.1} parent=1 // loop_header
      %s28 = sphi 0, %s32
      %p29 = scmp.ge.s32.totalorder %s28, 4
      %s38 = sphi 0, %s40
      %s41 = sphi 0, %s38
      %s42 = sphi 0, %s41
      %s58 = sphi 0, %s42
      %s62 = sphi 0, %s62
      %s64 = sphi 0, %s62
      %s65 = sphi 0, %s64
      %s79 = sphi 0, %s65
      %s83 = sphi 0, %s83
      %s85 = sphi 0, %s83
      %s86 = sphi 0, %s85
      %s100 = sphi 0, %s86
      %s104 = sphi 0, %s104
      %s106 = sphi 0, %s104
      %s107 = sphi 0, %s106
      %s121 = sphi 0, %s107
      %s125 = sphi 0, %s125
      %s127 = sphi 0, %s125
      %s128 = sphi 0, %s127
      %s142 = sphi 0, %s128
      %s146 = sphi 0, %s146
      %s148 = sphi 0, %s146
      %s149 = sphi 0, %s148
      %s163 = sphi 0, %s149
      %s167 = sphi 0, %s167
      %s169 = sphi 0, %s167
      %s170 = sphi 0, %s169
      %s184 = sphi 0, %s170
      %s188 = sphi 0, %s188
      %s190 = sphi 0, %s188
      %s191 = sphi 0, %s190
      %s205 = sphi 0, %s191
      %s209 = sphi 0, %s209
      %s211 = sphi 0, %s209
      %s212 = sphi 0, %s211
      %s226 = sphi 0, %s212
      %s230 = sphi 0, %s230
      %s232 = sphi 0, %s230
      %s233 = sphi 0, %s232
      %s247 = sphi 0, %s233
      %s251 = sphi 0, %s251
      %s253 = sphi 0, %s251
      %s254 = sphi 0, %s253
      %s268 = sphi 0, %s254
      %s272 = sphi 0, %s272
      %s274 = sphi 0, %s272
      %s275 = sphi 0, %s274
      %s289 = sphi 0, %s275
      %s293 = sphi 0, %s293
      %s295 = sphi 0, %s293
      %s296 = sphi 0, %s295
      %s310 = sphi 0, %s296
      %s316 = sphi 0, %s318
      %s319 = sphi 0, %s316
      %s320 = sphi 0, %s319
      %s336 = sphi 0, %s320
      %s342 = sphi 0, %s344
      %s345 = sphi 0, %s342
      %s346 = sphi 0, %s345
      %s362 = sphi 0, %s346
      %s368 = sphi 0, %s370
      %s371 = sphi 0, %s368
      %s372 = sphi 0, %s371
      %s388 = sphi 0, %s372
    $region4: #{catac_forward.1} parent=1 // loop_header_branch
      %31 = sbr.rel (%p29) target = $region8
    $region5: #{catac_forward.1} parent=1 // loop_body
      %s33 = ssub.s32 %s28, 1
      %s34 = ssub.s32 %s28, 2
      %s35 = sadd.s32 %s28, 1
      %s36 = ssub.s32 %s28, %s35
      %p37 = scmp.eq.s32.totalorder %s36, 0
      %s39 = sadd.s32 %s38, 1
      %s40 = scalar_select %p37, %s38, %s39
      %p43 = pneg %p37
      %p44 = scmp.eq.s32.totalorder %s28, 1
      %p45 = por %p43, %p44
      %p46 = scmp.ne.s32.totalorder %s38, %s41
      %p47 = scmp.eq.s32.totalorder %s28, 0
      %p48 = por %p46, %p47
      %p49 = scmp.ne.s32.totalorder %s38, %s41
      %p50 = scmp.eq.s32.totalorder %s33, 1
      %p51 = por %p49, %p50
      %p52 = scmp.ne.s32.totalorder %s41, %s42
      %p53 = scmp.eq.s32.totalorder %s33, 0
      %p54 = por %p52, %p53
      %p55 = scmp.ne.s32.totalorder %s41, %s42
      %p56 = scmp.eq.s32.totalorder %s34, 1
      %p57 = por %p55, %p56
      %p59 = scmp.ne.s32.totalorder %s42, %s58
      %p60 = scmp.eq.s32.totalorder %s34, 0
      %p61 = por %p59, %p60
      %s63 = sadd.s32 %s62, 1
      %p66 = scmp.eq.s32.totalorder %s28, 1
      %p67 = scmp.ne.s32.totalorder %s62, %s64
      %p68 = scmp.eq.s32.totalorder %s28, 0
      %p69 = por %p67, %p68
      %p70 = scmp.ne.s32.totalorder %s62, %s64
      %p71 = scmp.eq.s32.totalorder %s33, 1
      %p72 = por %p70, %p71
      %p73 = scmp.ne.s32.totalorder %s64, %s65
      %p74 = scmp.eq.s32.totalorder %s33, 0
      %p75 = por %p73, %p74
      %p76 = scmp.ne.s32.totalorder %s64, %s65
      %p77 = scmp.eq.s32.totalorder %s34, 1
      %p78 = por %p76, %p77
      %p80 = scmp.ne.s32.totalorder %s65, %s79
      %p81 = scmp.eq.s32.totalorder %s34, 0
      %p82 = por %p80, %p81
      %s84 = sadd.s32 %s83, 1
      %p87 = scmp.eq.s32.totalorder %s28, 1
      %p88 = scmp.ne.s32.totalorder %s83, %s85
      %p89 = scmp.eq.s32.totalorder %s28, 0
      %p90 = por %p88, %p89
      %p91 = scmp.ne.s32.totalorder %s83, %s85
      %p92 = scmp.eq.s32.totalorder %s33, 1
      %p93 = por %p91, %p92
      %p94 = scmp.ne.s32.totalorder %s85, %s86
      %p95 = scmp.eq.s32.totalorder %s33, 0
      %p96 = por %p94, %p95
      %p97 = scmp.ne.s32.totalorder %s85, %s86
      %p98 = scmp.eq.s32.totalorder %s34, 1
      %p99 = por %p97, %p98
      %p101 = scmp.ne.s32.totalorder %s86, %s100
      %p102 = scmp.eq.s32.totalorder %s34, 0
      %p103 = por %p101, %p102
      %s105 = sadd.s32 %s104, 1
      %p108 = scmp.eq.s32.totalorder %s28, 1
      %p109 = scmp.ne.s32.totalorder %s104, %s106
      %p110 = scmp.eq.s32.totalorder %s28, 0
      %p111 = por %p109, %p110
      %p112 = scmp.ne.s32.totalorder %s104, %s106
      %p113 = scmp.eq.s32.totalorder %s33, 1
      %p114 = por %p112, %p113
      %p115 = scmp.ne.s32.totalorder %s106, %s107
      %p116 = scmp.eq.s32.totalorder %s33, 0
      %p117 = por %p115, %p116
      %p118 = scmp.ne.s32.totalorder %s106, %s107
      %p119 = scmp.eq.s32.totalorder %s34, 1
      %p120 = por %p118, %p119
      %p122 = scmp.ne.s32.totalorder %s107, %s121
      %p123 = scmp.eq.s32.totalorder %s34, 0
      %p124 = por %p122, %p123
      %s126 = sadd.s32 %s125, 1
      %p129 = scmp.eq.s32.totalorder %s28, 1
      %p130 = scmp.ne.s32.totalorder %s125, %s127
      %p131 = scmp.eq.s32.totalorder %s28, 0
      %p132 = por %p130, %p131
      %p133 = scmp.ne.s32.totalorder %s125, %s127
      %p134 = scmp.eq.s32.totalorder %s33, 1
      %p135 = por %p133, %p134
      %p136 = scmp.ne.s32.totalorder %s127, %s128
      %p137 = scmp.eq.s32.totalorder %s33, 0
      %p138 = por %p136, %p137
      %p139 = scmp.ne.s32.totalorder %s127, %s128
      %p140 = scmp.eq.s32.totalorder %s34, 1
      %p141 = por %p139, %p140
      %p143 = scmp.ne.s32.totalorder %s128, %s142
      %p144 = scmp.eq.s32.totalorder %s34, 0
      %p145 = por %p143, %p144
      %s147 = sadd.s32 %s146, 1
      %p150 = scmp.eq.s32.totalorder %s28, 1
      %p151 = scmp.ne.s32.totalorder %s146, %s148
      %p152 = scmp.eq.s32.totalorder %s28, 0
      %p153 = por %p151, %p152
      %p154 = scmp.ne.s32.totalorder %s146, %s148
      %p155 = scmp.eq.s32.totalorder %s33, 1
      %p156 = por %p154, %p155
      %p157 = scmp.ne.s32.totalorder %s148, %s149
      %p158 = scmp.eq.s32.totalorder %s33, 0
      %p159 = por %p157, %p158
      %p160 = scmp.ne.s32.totalorder %s148, %s149
      %p161 = scmp.eq.s32.totalorder %s34, 1
      %p162 = por %p160, %p161
      %p164 = scmp.ne.s32.totalorder %s149, %s163
      %p165 = scmp.eq.s32.totalorder %s34, 0
      %p166 = por %p164, %p165
      %s168 = sadd.s32 %s167, 1
      %p171 = scmp.eq.s32.totalorder %s28, 1
      %p172 = scmp.ne.s32.totalorder %s167, %s169
      %p173 = scmp.eq.s32.totalorder %s28, 0
      %p174 = por %p172, %p173
      %p175 = scmp.ne.s32.totalorder %s167, %s169
      %p176 = scmp.eq.s32.totalorder %s33, 1
      %p177 = por %p175, %p176
      %p178 = scmp.ne.s32.totalorder %s169, %s170
      %p179 = scmp.eq.s32.totalorder %s33, 0
      %p180 = por %p178, %p179
      %p181 = scmp.ne.s32.totalorder %s169, %s170
      %p182 = scmp.eq.s32.totalorder %s34, 1
      %p183 = por %p181, %p182
      %p185 = scmp.ne.s32.totalorder %s170, %s184
      %p186 = scmp.eq.s32.totalorder %s34, 0
      %p187 = por %p185, %p186
      %s189 = sadd.s32 %s188, 1
      %p192 = scmp.eq.s32.totalorder %s28, 1
      %p193 = scmp.ne.s32.totalorder %s188, %s190
      %p194 = scmp.eq.s32.totalorder %s28, 0
      %p195 = por %p193, %p194
      %p196 = scmp.ne.s32.totalorder %s188, %s190
      %p197 = scmp.eq.s32.totalorder %s33, 1
      %p198 = por %p196, %p197
      %p199 = scmp.ne.s32.totalorder %s190, %s191
      %p200 = scmp.eq.s32.totalorder %s33, 0
      %p201 = por %p199, %p200
      %p202 = scmp.ne.s32.totalorder %s190, %s191
      %p203 = scmp.eq.s32.totalorder %s34, 1
      %p204 = por %p202, %p203
      %p206 = scmp.ne.s32.totalorder %s191, %s205
      %p207 = scmp.eq.s32.totalorder %s34, 0
      %p208 = por %p206, %p207
      %s210 = sadd.s32 %s209, 1
      %p213 = scmp.eq.s32.totalorder %s28, 1
      %p214 = scmp.ne.s32.totalorder %s209, %s211
      %p215 = scmp.eq.s32.totalorder %s28, 0
      %p216 = por %p214, %p215
      %p217 = scmp.ne.s32.totalorder %s209, %s211
      %p218 = scmp.eq.s32.totalorder %s33, 1
      %p219 = por %p217, %p218
      %p220 = scmp.ne.s32.totalorder %s211, %s212
      %p221 = scmp.eq.s32.totalorder %s33, 0
      %p222 = por %p220, %p221
      %p223 = scmp.ne.s32.totalorder %s211, %s212
      %p224 = scmp.eq.s32.totalorder %s34, 1
      %p225 = por %p223, %p224
      %p227 = scmp.ne.s32.totalorder %s212, %s226
      %p228 = scmp.eq.s32.totalorder %s34, 0
      %p229 = por %p227, %p228
      %s231 = sadd.s32 %s230, 1
      %p234 = scmp.eq.s32.totalorder %s28, 1
      %p235 = scmp.ne.s32.totalorder %s230, %s232
      %p236 = scmp.eq.s32.totalorder %s28, 0
      %p237 = por %p235, %p236
      %p238 = scmp.ne.s32.totalorder %s230, %s232
      %p239 = scmp.eq.s32.totalorder %s33, 1
      %p240 = por %p238, %p239
      %p241 = scmp.ne.s32.totalorder %s232, %s233
      %p242 = scmp.eq.s32.totalorder %s33, 0
      %p243 = por %p241, %p242
      %p244 = scmp.ne.s32.totalorder %s232, %s233
      %p245 = scmp.eq.s32.totalorder %s34, 1
      %p246 = por %p244, %p245
      %p248 = scmp.ne.s32.totalorder %s233, %s247
      %p249 = scmp.eq.s32.totalorder %s34, 0
      %p250 = por %p248, %p249
      %s252 = sadd.s32 %s251, 1
      %p255 = scmp.eq.s32.totalorder %s28, 1
      %p256 = scmp.ne.s32.totalorder %s251, %s253
      %p257 = scmp.eq.s32.totalorder %s28, 0
      %p258 = por %p256, %p257
      %p259 = scmp.ne.s32.totalorder %s251, %s253
      %p260 = scmp.eq.s32.totalorder %s33, 1
      %p261 = por %p259, %p260
      %p262 = scmp.ne.s32.totalorder %s253, %s254
      %p263 = scmp.eq.s32.totalorder %s33, 0
      %p264 = por %p262, %p263
      %p265 = scmp.ne.s32.totalorder %s253, %s254
      %p266 = scmp.eq.s32.totalorder %s34, 1
      %p267 = por %p265, %p266
      %p269 = scmp.ne.s32.totalorder %s254, %s268
      %p270 = scmp.eq.s32.totalorder %s34, 0
      %p271 = por %p269, %p270
      %s273 = sadd.s32 %s272, 1
      %p276 = scmp.eq.s32.totalorder %s28, 1
      %p277 = scmp.ne.s32.totalorder %s272, %s274
      %p278 = scmp.eq.s32.totalorder %s28, 0
      %p279 = por %p277, %p278
      %p280 = scmp.ne.s32.totalorder %s272, %s274
      %p281 = scmp.eq.s32.totalorder %s33, 1
      %p282 = por %p280, %p281
      %p283 = scmp.ne.s32.totalorder %s274, %s275
      %p284 = scmp.eq.s32.totalorder %s33, 0
      %p285 = por %p283, %p284
      %p286 = scmp.ne.s32.totalorder %s274, %s275
      %p287 = scmp.eq.s32.totalorder %s34, 1
      %p288 = por %p286, %p287
      %p290 = scmp.ne.s32.totalorder %s275, %s289
      %p291 = scmp.eq.s32.totalorder %s34, 0
      %p292 = por %p290, %p291
      %s294 = sadd.s32 %s293, 1
      %p297 = scmp.eq.s32.totalorder %s28, 1
      %p298 = scmp.ne.s32.totalorder %s293, %s295
      %p299 = scmp.eq.s32.totalorder %s28, 0
      %p300 = por %p298, %p299
      %p301 = scmp.ne.s32.totalorder %s293, %s295
      %p302 = scmp.eq.s32.totalorder %s33, 1
      %p303 = por %p301, %p302
      %p304 = scmp.ne.s32.totalorder %s295, %s296
      %p305 = scmp.eq.s32.totalorder %s33, 0
      %p306 = por %p304, %p305
      %p307 = scmp.ne.s32.totalorder %s295, %s296
      %p308 = scmp.eq.s32.totalorder %s34, 1
      %p309 = por %p307, %p308
      %p311 = scmp.ne.s32.totalorder %s296, %s310
      %p312 = scmp.eq.s32.totalorder %s34, 0
      %p313 = por %p311, %p312
      %s314 = ssub.s32 %s28, %s35
      %p315 = scmp.eq.s32.totalorder %s314, 0
      %s317 = sadd.s32 %s316, 1
      %s318 = scalar_select %p315, %s316, %s317
      %p321 = pneg %p315
      %p322 = scmp.eq.s32.totalorder %s28, 1
      %p323 = por %p321, %p322
      %p324 = scmp.ne.s32.totalorder %s316, %s319
      %p325 = scmp.eq.s32.totalorder %s28, 0
      %p326 = por %p324, %p325
      %p327 = scmp.ne.s32.totalorder %s316, %s319
      %p328 = scmp.eq.s32.totalorder %s33, 1
      %p329 = por %p327, %p328
      %p330 = scmp.ne.s32.totalorder %s319, %s320
      %p331 = scmp.eq.s32.totalorder %s33, 0
      %p332 = por %p330, %p331
      %p333 = scmp.ne.s32.totalorder %s319, %s320
      %p334 = scmp.eq.s32.totalorder %s34, 1
      %p335 = por %p333, %p334
      %p337 = scmp.ne.s32.totalorder %s320, %s336
      %p338 = scmp.eq.s32.totalorder %s34, 0
      %p339 = por %p337, %p338
      %s340 = ssub.s32 %s28, %s35
      %p341 = scmp.eq.s32.totalorder %s340, 0
      %s343 = sadd.s32 %s342, 1
      %s344 = scalar_select %p341, %s342, %s343
      %p347 = pneg %p341
      %p348 = scmp.eq.s32.totalorder %s28, 1
      %p349 = por %p347, %p348
      %p350 = scmp.ne.s32.totalorder %s342, %s345
      %p351 = scmp.eq.s32.totalorder %s28, 0
      %p352 = por %p350, %p351
      %p353 = scmp.ne.s32.totalorder %s342, %s345
      %p354 = scmp.eq.s32.totalorder %s33, 1
      %p355 = por %p353, %p354
      %p356 = scmp.ne.s32.totalorder %s345, %s346
      %p357 = scmp.eq.s32.totalorder %s33, 0
      %p358 = por %p356, %p357
      %p359 = scmp.ne.s32.totalorder %s345, %s346
      %p360 = scmp.eq.s32.totalorder %s34, 1
      %p361 = por %p359, %p360
      %p363 = scmp.ne.s32.totalorder %s346, %s362
      %p364 = scmp.eq.s32.totalorder %s34, 0
      %p365 = por %p363, %p364
      %s366 = ssub.s32 %s28, %s35
      %p367 = scmp.eq.s32.totalorder %s366, 0
      %s369 = sadd.s32 %s368, 1
      %s370 = scalar_select %p367, %s368, %s369
      %p373 = pneg %p367
      %p374 = scmp.eq.s32.totalorder %s28, 1
      %p375 = por %p373, %p374
      %p376 = scmp.ne.s32.totalorder %s368, %s371
      %p377 = scmp.eq.s32.totalorder %s28, 0
      %p378 = por %p376, %p377
      %p379 = scmp.ne.s32.totalorder %s368, %s371
      %p380 = scmp.eq.s32.totalorder %s33, 1
      %p381 = por %p379, %p380
      %p382 = scmp.ne.s32.totalorder %s371, %s372
      %p383 = scmp.eq.s32.totalorder %s33, 0
      %p384 = por %p382, %p383
      %p385 = scmp.ne.s32.totalorder %s371, %s372
      %p386 = scmp.eq.s32.totalorder %s34, 1
      %p387 = por %p385, %p386
      %p389 = scmp.ne.s32.totalorder %s372, %s388
      %p390 = scmp.eq.s32.totalorder %s34, 0
      %p391 = por %p389, %p390
      %p392 = scmp.le.s32.totalorder 1, %s28
      %p393 = scmp.lt.s32.totalorder %s28, 3
      %p394 = pnand %p392, %p393
      %p395 = pneg %p394
      // Predicated region
      $region9: #{catac_forward.1} parent=5 // pred_check
        _
      $region10: #{catac_forward.1} parent=5 // pred_check_branch
        %397 = sbr.rel (%p394) target = $region12
      $region11: #{catac_forward.1} parent=5 // pred_region
        %s398 = ssub.s32 %s28, 1
        // Predicated region
        $region13: #{catac_forward.1} parent=11 // pred_check
          %p399 = pneg %p75
        $region14: #{catac_forward.1} parent=11 // pred_check_branch
          %401 = sbr.rel (%p399) target = $region16
        $region15: #{catac_forward.1} parent=11 // pred_region
          _
        $region16: #{catac_forward.1} parent=11 // pred_fallthru
          _
        // Predicated region
        $region17: #{catac_forward.1} parent=11 // pred_check
          %p402 = pneg %p96
        $region18: #{catac_forward.1} parent=11 // pred_check_branch
          %404 = sbr.rel (%p402) target = $region20
        $region19: #{catac_forward.1} parent=11 // pred_region
          _
        $region20: #{catac_forward.1} parent=11 // pred_fallthru
          _
        // Predicated region
        $region21: #{catac_forward.1} parent=11 // pred_check
          %p405 = pneg %p117
        $region22: #{catac_forward.1} parent=11 // pred_check_branch
          %407 = sbr.rel (%p405) target = $region24
        $region23: #{catac_forward.1} parent=11 // pred_region
          _
        $region24: #{catac_forward.1} parent=11 // pred_fallthru
          _
        // Predicated region
        $region25: #{catac_forward.1} parent=11 // pred_check
          %p408 = pneg %p138
        $region26: #{catac_forward.1} parent=11 // pred_check_branch
          %410 = sbr.rel (%p408) target = $region28
        $region27: #{catac_forward.1} parent=11 // pred_region
          _
        $region28: #{catac_forward.1} parent=11 // pred_fallthru
          _
        // Predicated region
        $region29: #{catac_forward.1} parent=11 // pred_check
          %p411 = pneg %p159
        $region30: #{catac_forward.1} parent=11 // pred_check_branch
          %413 = sbr.rel (%p411) target = $region32
        $region31: #{catac_forward.1} parent=11 // pred_region
          _
        $region32: #{catac_forward.1} parent=11 // pred_fallthru
          _
        // Predicated region
        $region33: #{catac_forward.1} parent=11 // pred_check
          %p414 = pneg %p180
        $region34: #{catac_forward.1} parent=11 // pred_check_branch
          %416 = sbr.rel (%p414) target = $region36
        $region35: #{catac_forward.1} parent=11 // pred_region
          _
        $region36: #{catac_forward.1} parent=11 // pred_fallthru
          _
        // Predicated region
        $region37: #{catac_forward.1} parent=11 // pred_check
          %p417 = pneg %p201
        $region38: #{catac_forward.1} parent=11 // pred_check_branch
          %419 = sbr.rel (%p417) target = $region40
        $region39: #{catac_forward.1} parent=11 // pred_region
          _
        $region40: #{catac_forward.1} parent=11 // pred_fallthru
          _
        // Predicated region
        $region41: #{catac_forward.1} parent=11 // pred_check
          %p420 = pneg %p222
        $region42: #{catac_forward.1} parent=11 // pred_check_branch
          %422 = sbr.rel (%p420) target = $region44
        $region43: #{catac_forward.1} parent=11 // pred_region
          _
        $region44: #{catac_forward.1} parent=11 // pred_fallthru
          _
        // Predicated region
        $region45: #{catac_forward.1} parent=11 // pred_check
          %p423 = pneg %p243
        $region46: #{catac_forward.1} parent=11 // pred_check_branch
          %425 = sbr.rel (%p423) target = $region48
        $region47: #{catac_forward.1} parent=11 // pred_region
          _
        $region48: #{catac_forward.1} parent=11 // pred_fallthru
          _
        // Predicated region
        $region49: #{catac_forward.1} parent=11 // pred_check
          %p426 = pneg %p264
        $region50: #{catac_forward.1} parent=11 // pred_check_branch
          %428 = sbr.rel (%p426) target = $region52
        $region51: #{catac_forward.1} parent=11 // pred_region
          _
        $region52: #{catac_forward.1} parent=11 // pred_fallthru
          _
        // Predicated region
        $region53: #{catac_forward.1} parent=11 // pred_check
          %p429 = pneg %p285
        $region54: #{catac_forward.1} parent=11 // pred_check_branch
          %431 = sbr.rel (%p429) target = $region56
        $region55: #{catac_forward.1} parent=11 // pred_region
          _
        $region56: #{catac_forward.1} parent=11 // pred_fallthru
          _
        // Predicated region
        $region57: #{catac_forward.1} parent=11 // pred_check
          %p432 = pneg %p306
        $region58: #{catac_forward.1} parent=11 // pred_check_branch
          %434 = sbr.rel (%p432) target = $region60
        $region59: #{catac_forward.1} parent=11 // pred_region
          _
        $region60: #{catac_forward.1} parent=11 // pred_fallthru
          _
      $region12: #{catac_forward.1} parent=5 // pred_fallthru
        _
      %p435 = scmp.lt.s32.totalorder %s28, 2
      // Predicated region
      $region61: #{catac_forward.1} parent=5 // pred_check
        %p436 = pneg %p435
      $region62: #{catac_forward.1} parent=5 // pred_check_branch
        %438 = sbr.rel (%p436) target = $region64
      $region63: #{catac_forward.1} parent=5 // pred_region
        // Predicated region
        $region65: #{catac_forward.1} parent=63 // pred_check
          %p439 = pneg %p48
        $region66: #{catac_forward.1} parent=63 // pred_check_branch
          %441 = sbr.rel (%p439) target = $region68
        $region67: #{catac_forward.1} parent=63 // pred_region
          %p442 = scmp.lt.s32.totalorder %s28, 1
          %s443 = scalar_select %p442, %s28, 1
          %s444 = smul.addr %s443, 4
          %s445 = smul.addr %s444, 8
          %s446 = scalar_lea.vmem %s0, %s445
        $region68: #{catac_forward.1} parent=63 // pred_fallthru
          _
      $region64: #{catac_forward.1} parent=5 // pred_fallthru
        _
      %p447 = scmp.le.s32.totalorder 1, %s28
      %p448 = scmp.lt.s32.totalorder %s28, 3
      %p449 = pnand %p447, %p448
      %p450 = pneg %p449
      // Predicated region
      $region69: #{catac_forward.1} parent=5 // pred_check
        _
      $region70: #{catac_forward.1} parent=5 // pred_check_branch
        %452 = sbr.rel (%p449) target = $region72
      $region71: #{catac_forward.1} parent=5 // pred_region
        %s453 = ssub.s32 %s28, 1
        %p454 = scmp.lt.s32.totalorder %s33, 1
        %s455 = scalar_select %p454, %s33, 1
        %s456 = smul.addr %s455, 4
        %s457 = smul.addr %s456, 8
        %s458 = scalar_lea.vmem %s0, %s457
        %p459 = pneg %p54
        %p460 = pneg %p51
        %p461 = pneg %p75
        %p462 = pneg %p72
        %p463 = pneg %p96
        %p464 = pneg %p93
        %p465 = pneg %p117
        %p466 = pneg %p114
        %p467 = pneg %p138
        %p468 = pneg %p135
        %p469 = pneg %p159
        %p470 = pneg %p156
        %p471 = pneg %p180
        %p472 = pneg %p177
        %p473 = pneg %p201
        %p474 = pneg %p198
        %p475 = pneg %p222
        %p476 = pneg %p219
        %p477 = pneg %p243
        %p478 = pneg %p240
        %p479 = pneg %p264
        %p480 = pneg %p261
        %p481 = pneg %p285
        %p482 = pneg %p282
        %p483 = pneg %p306
        %p484 = pneg %p303
        %p485 = pneg %p332
        %p486 = pneg %p329
        %s487 = sand.u32 %s319, 1
        %s488 = scalar_lea.sflag [#allocation3], %s487
        %s489 = sand.u32 %s319, 1
        %s490 = smul.addr %s489, 32
        %s491 = scalar_lea.vmem [#allocation2], %s490
        %p492 = pneg %p358
        %p493 = pneg %p355
        %p494 = scmp.lt.s32.totalorder %s33, 1
        %s495 = scalar_select %p494, %s33, 1
        %s496 = smul.addr %s495, 2
        %s497 = scalar_lea.vmem %s14, %s496
        %p498 = pneg %p384
        %p499 = pneg %p381
        %s500 = sand.u32 %s371, 1
        %s501 = scalar_lea.sflag [#allocation5], %s500
        %s502 = sand.u32 %s371, 1
        %s503 = scalar_lea.vmem [#allocation4], %s502
        %p504 = scmp.lt.s32.totalorder %s33, 1
        %s505 = scalar_select %p504, %s33, 1
        %s506 = smul.addr %s505, 4
        %s507 = smul.addr %s506, 8
        %s508 = scalar_lea.vmem %s0, %s507
        %p509 = scmp.lt.s32.totalorder %s33, 1
        %s510 = scalar_select %p509, %s33, 1
        %s511 = smul.addr %s510, 2
        %s512 = scalar_lea.vmem %s14, %s511
        %v514 = vld [vmem:[%s508] sm:$0xff]
        %v515 = vld [vmem:[%s508 + $0x8] sm:$0xff]
        %v516 = vld [vmem:[%s508 + $0x10] sm:$0xff]
        %v517 = vld [vmem:[%s508 + $0x18] sm:$0xff]
        %v518 = vld [vmem:[%s1] sm:$0xff]
        %v519 = vld [vmem:[%s1 + $0x8] sm:$0xff]
        %v520 = vld [vmem:[%s1 + $0x10] sm:$0xff]
        %v521 = vld [vmem:[%s1 + $0x18] sm:$0xff]
        %v522 = vld [vmem:[%s2] sm:$0xff]
        %v523 = vld [vmem:[%s2 + $0x8] sm:$0xff]
        %v524 = vld [vmem:[%s2 + $0x10] sm:$0xff]
        %v525 = vld [vmem:[%s2 + $0x18] sm:$0xff]
        %530 = vrot.lane.b32.xlu0 %v514, 127
        %v531 = vpop.permute.xlu0 %530
        %532 = vrot.lane.b32.xlu0 %v515, 127
        %v533 = vpop.permute.xlu0 %532
        %534 = vrot.lane.b32.xlu0 %v516, 127
        %v535 = vpop.permute.xlu0 %534
        %536 = vrot.lane.b32.xlu0 %v517, 127
        %v537 = vpop.permute.xlu0 %536
        %vm538 = vcmask 1039360
        %v539 = vsel %vm538, %v531, %v533
        %v540 = vsel %vm538, %v535, %v537
        %545 = vrot.lane.b32.xlu0 %v514, 126
        %v546 = vpop.permute.xlu0 %545
        %547 = vrot.lane.b32.xlu0 %v515, 126
        %v548 = vpop.permute.xlu0 %547
        %549 = vrot.lane.b32.xlu0 %v516, 126
        %v550 = vpop.permute.xlu0 %549
        %551 = vrot.lane.b32.xlu0 %v517, 126
        %v552 = vpop.permute.xlu0 %551
        %vm553 = vcmask 1031168
        %v554 = vsel %vm553, %v546, %v548
        %v555 = vsel %vm553, %v550, %v552
        %560 = vrot.lane.b32.xlu0 %v514, 125
        %v561 = vpop.permute.xlu0 %560
        %562 = vrot.lane.b32.xlu0 %v515, 125
        %v563 = vpop.permute.xlu0 %562
        %564 = vrot.lane.b32.xlu0 %v516, 125
        %v565 = vpop.permute.xlu0 %564
        %566 = vrot.lane.b32.xlu0 %v517, 125
        %v567 = vpop.permute.xlu0 %566
        %vm568 = vcmask 1022976
        %v569 = vsel %vm568, %v561, %v563
        %v570 = vsel %vm568, %v565, %v567
        %575 = vrot.lane.b32.xlu0 %v514, 124
        %v576 = vpop.permute.xlu0 %575
        %577 = vrot.lane.b32.xlu0 %v515, 124
        %v578 = vpop.permute.xlu0 %577
        %579 = vrot.lane.b32.xlu0 %v516, 124
        %v580 = vpop.permute.xlu0 %579
        %581 = vrot.lane.b32.xlu0 %v517, 124
        %v582 = vpop.permute.xlu0 %581
        %vm583 = vcmask 1014784
        %v584 = vsel %vm583, %v576, %v578
        %v585 = vsel %vm583, %v580, %v582
        %v590 = vpack.c.bf16 %v516, %v514
        %v591 = vpack.c.bf16 %v517, %v515
        %v592 = vpack.c.bf16 %v540, %v539
        %v593 = vpack.c.bf16 %v537, %v533
        %v594 = vpack.c.bf16 %v555, %v554
        %v595 = vpack.c.bf16 %v552, %v548
        %v596 = vpack.c.bf16 %v570, %v569
        %v597 = vpack.c.bf16 %v567, %v563
        %v598 = vpack.c.bf16 %v585, %v584
        %v599 = vpack.c.bf16 %v582, %v578
        %v600 = vpack.c.bf16 %v519, %v518
        %v601 = vpack.c.bf16 %v521, %v520
        %603 = vset.pattern.permute.xlu0 0
        %604 = vperm.xlu0 %603, %v522
        %v605 = vpop.permute.xlu0 %604
        %608 = vset.pattern.permute.xlu0 0
        %609 = vperm.xlu0 %608, %v523
        %v610 = vpop.permute.xlu0 %609
        %613 = vset.pattern.permute.xlu0 0
        %614 = vperm.xlu0 %613, %v524
        %v615 = vpop.permute.xlu0 %614
        %618 = vset.pattern.permute.xlu0 0
        %619 = vperm.xlu0 %618, %v525
        %v620 = vpop.permute.xlu0 %619
        %vm622 = vcmask 654336
        %v624 = vsel %vm622, %v600, 0
        %v627 = vsel %vm622, %v601, 0
        %629 = vmatprep.subr.bf16.mxu0 %v591
        %630 = vmatpush1.bf16.msra.mxu0 %v590
        %631 = vmatprep.subr.bf16.mxu0 %v593
        %632 = vmatpush1.bf16.msra.mxu0 %v592
        %633 = vmatprep.subr.bf16.mxu0 %v595
        %634 = vmatpush1.bf16.msra.mxu0 %v594
        %635 = vmatprep.subr.bf16.mxu0 %v597
        %636 = vmatpush1.bf16.msra.mxu0 %v596
        %637 = vmatprep.subr.bf16.mxu0 %v599
        %638 = vmatpush1.bf16.msra.mxu0 %v598
        %639 = vmatprep.subr.bf16.mxu0 0
        %640 = vmatpush1.bf16.msra.mxu0 0
        %641 = vmatprep.subr.bf16.mxu0 0
        %642 = vmatpush1.bf16.msra.mxu0 0
        %643 = vmatprep.subr.bf16.mxu0 0
        %644 = vmatpush1.bf16.msra.mxu0 0
        %645 = vmatprep.subr.bf16.mxu0 0
        %646 = vmatpush1.bf16.msra.mxu0 0
        %647 = vmatprep.subr.bf16.mxu0 0
        %648 = vmatpush1.bf16.msra.mxu0 0
        %649 = vmatprep.subr.bf16.mxu0 0
        %650 = vmatpush1.bf16.msra.mxu0 0
        %651 = vmatprep.subr.bf16.mxu0 0
        %652 = vmatpush1.bf16.msra.mxu0 0
        %653 = vmatprep.subr.bf16.mxu0 0
        %654 = vmatpush1.bf16.msra.mxu0 0
        %655 = vmatprep.subr.bf16.mxu0 0
        %656 = vmatpush1.bf16.msra.mxu0 0
        %657 = vmatprep.subr.bf16.mxu0 0
        %658 = vmatpush1.bf16.msra.mxu0 0
        %659 = vmatprep.subr.bf16.mxu0 0
        %660 = vmatpush1.bf16.msra.mxu0 0
        %661 = vmatprep.mubr.bf16.mxu0 0
        %662 = vmatmul.mubr.bf16.gmra.mrb[0].mxu0 %v624
        %v663 = vpop.f32.mrb[0].mxu0
        %v664 = vadd.f32 %v605, %v663
        %v665 = vpop.f32.mrb[0].mxu0
        %v666 = vadd.f32 %v605, %v665
        %v667 = vpop.f32.mrb[0].mxu0
        %v668 = vadd.f32 %v610, %v667
        %v669 = vpop.f32.mrb[0].mxu0
        %v670 = vadd.f32 %v610, %v669
        %671 = vmatprep.mubr.bf16.mxu0 0
        %672 = vmatmul.mubr.bf16.gmra.mrb[0].mxu0 %v627
        %v673 = vpop.f32.mrb[0].mxu0
        %v674 = vadd.f32 %v615, %v673
        %v675 = vpop.f32.mrb[0].mxu0
        %v676 = vadd.f32 %v615, %v675
        %v677 = vpop.f32.mrb[0].mxu0
        %v678 = vadd.f32 %v620, %v677
        %v679 = vpop.f32.mrb[0].mxu0
        %v680 = vadd.f32 %v620, %v679
        %681 = vdwg.mxu0
        %v682 = vmax.f32 %v664, 0.0
        %v683 = vmax.f32 %v666, 0.0
        %v684 = vmax.f32 %v668, 0.0
        %v685 = vmax.f32 %v670, 0.0
        %v686 = vmax.f32 %v674, 0.0
        %v687 = vmax.f32 %v676, 0.0
        %v688 = vmax.f32 %v678, 0.0
        %v689 = vmax.f32 %v680, 0.0
        %v690 = vld [vmem:[%s3] sm:$0xff]
        %v691 = vld [vmem:[%s3 + $0x8] sm:$0xff]
        %v692 = vld [vmem:[%s3 + $0x10] sm:$0xff]
        %v693 = vld [vmem:[%s3 + $0x18] sm:$0xff]
        %v694 = vld [vmem:[%s4] sm:$0xff]
        %v695 = vld [vmem:[%s4 + $0x8] sm:$0xff]
        %v696 = vld [vmem:[%s4 + $0x10] sm:$0xff]
        %v697 = vld [vmem:[%s4 + $0x18] sm:$0xff]
        %706 = vrot.lane.b32.xlu0 %v682, 126
        %v707 = vpop.permute.xlu0 %706
        %708 = vrot.lane.b32.xlu0 %v683, 126
        %v709 = vpop.permute.xlu0 %708
        %710 = vrot.lane.b32.xlu0 %v684, 126
        %v711 = vpop.permute.xlu0 %710
        %712 = vrot.lane.b32.xlu0 %v685, 126
        %v713 = vpop.permute.xlu0 %712
        %714 = vrot.lane.b32.xlu0 %v686, 126
        %v715 = vpop.permute.xlu0 %714
        %716 = vrot.lane.b32.xlu0 %v687, 126
        %v717 = vpop.permute.xlu0 %716
        %718 = vrot.lane.b32.xlu0 %v688, 126
        %v719 = vpop.permute.xlu0 %718
        %720 = vrot.lane.b32.xlu0 %v689, 126
        %v721 = vpop.permute.xlu0 %720
        %v722 = vsel %vm553, %v707, %v709
        %v723 = vsel %vm553, %v711, %v713
        %v724 = vsel %vm553, %v715, %v717
        %v725 = vsel %vm553, %v719, %v721
        %734 = vrot.lane.b32.xlu0 %v682, 124
        %v735 = vpop.permute.xlu0 %734
        %736 = vrot.lane.b32.xlu0 %v683, 124
        %v737 = vpop.permute.xlu0 %736
        %738 = vrot.lane.b32.xlu0 %v684, 124
        %v739 = vpop.permute.xlu0 %738
        %740 = vrot.lane.b32.xlu0 %v685, 124
        %v741 = vpop.permute.xlu0 %740
        %742 = vrot.lane.b32.xlu0 %v686, 124
        %v743 = vpop.permute.xlu0 %742
        %744 = vrot.lane.b32.xlu0 %v687, 124
        %v745 = vpop.permute.xlu0 %744
        %746 = vrot.lane.b32.xlu0 %v688, 124
        %v747 = vpop.permute.xlu0 %746
        %748 = vrot.lane.b32.xlu0 %v689, 124
        %v749 = vpop.permute.xlu0 %748
        %v750 = vsel %vm583, %v735, %v737
        %v751 = vsel %vm583, %v739, %v741
        %v752 = vsel %vm583, %v743, %v745
        %v753 = vsel %vm583, %v747, %v749
        %v762 = vpack.c.bf16 %v684, %v682
        %v763 = vpack.c.bf16 %v685, %v683
        %v764 = vpack.c.bf16 %v688, %v686
        %v765 = vpack.c.bf16 %v689, %v687
        %v766 = vpack.c.bf16 %v723, %v722
        %v767 = vpack.c.bf16 %v713, %v709
        %v768 = vpack.c.bf16 %v725, %v724
        %v769 = vpack.c.bf16 %v721, %v717
        %v770 = vpack.c.bf16 %v751, %v750
        %v771 = vpack.c.bf16 %v741, %v737
        %v772 = vpack.c.bf16 %v753, %v752
        %v773 = vpack.c.bf16 %v749, %v745
        %v774 = vpack.c.bf16 %v691, %v690
        %v775 = vpack.c.bf16 %v693, %v692
        %777 = vset.pattern.permute.xlu0 0
        %778 = vperm.xlu0 %777, %v694
        %v779 = vpop.permute.xlu0 %778
        %782 = vset.pattern.permute.xlu0 0
        %783 = vperm.xlu0 %782, %v695
        %v784 = vpop.permute.xlu0 %783
        %787 = vset.pattern.permute.xlu0 0
        %788 = vperm.xlu0 %787, %v696
        %v789 = vpop.permute.xlu0 %788
        %792 = vset.pattern.permute.xlu0 0
        %793 = vperm.xlu0 %792, %v697
        %v794 = vpop.permute.xlu0 %793
        %vm796 = vcmask 785408
        %v798 = vsel %vm796, %v774, 0
        %v801 = vsel %vm796, %v775, 0
        %803 = vmatprep.subr.bf16.mxu0 %v763
        %804 = vmatpush1.bf16.msra.mxu0 %v762
        %805 = vmatprep.subr.bf16.mxu0 %v765
        %806 = vmatpush1.bf16.msra.mxu0 %v764
        %807 = vmatprep.subr.bf16.mxu0 %v767
        %808 = vmatpush1.bf16.msra.mxu0 %v766
        %809 = vmatprep.subr.bf16.mxu0 %v769
        %810 = vmatpush1.bf16.msra.mxu0 %v768
        %811 = vmatprep.subr.bf16.mxu0 %v771
        %812 = vmatpush1.bf16.msra.mxu0 %v770
        %813 = vmatprep.subr.bf16.mxu0 %v773
        %814 = vmatpush1.bf16.msra.mxu0 %v772
        %815 = vmatprep.subr.bf16.mxu0 0
        %816 = vmatpush1.bf16.msra.mxu0 0
        %817 = vmatprep.subr.bf16.mxu0 0
        %818 = vmatpush1.bf16.msra.mxu0 0
        %819 = vmatprep.subr.bf16.mxu0 0
        %820 = vmatpush1.bf16.msra.mxu0 0
        %821 = vmatprep.subr.bf16.mxu0 0
        %822 = vmatpush1.bf16.msra.mxu0 0
        %823 = vmatprep.subr.bf16.mxu0 0
        %824 = vmatpush1.bf16.msra.mxu0 0
        %825 = vmatprep.subr.bf16.mxu0 0
        %826 = vmatpush1.bf16.msra.mxu0 0
        %827 = vmatprep.subr.bf16.mxu0 0
        %828 = vmatpush1.bf16.msra.mxu0 0
        %829 = vmatprep.subr.bf16.mxu0 0
        %830 = vmatpush1.bf16.msra.mxu0 0
        %831 = vmatprep.subr.bf16.mxu0 0
        %832 = vmatpush1.bf16.msra.mxu0 0
        %833 = vmatprep.subr.bf16.mxu0 0
        %834 = vmatpush1.bf16.msra.mxu0 0
        %835 = vmatprep.mubr.bf16.mxu0 0
        %836 = vmatmul.mubr.bf16.gmra.mrb[0].mxu0 %v798
        %v837 = vpop.f32.mrb[0].mxu0
        %v838 = vadd.f32 %v779, %v837
        %v839 = vpop.f32.mrb[0].mxu0
        %v840 = vadd.f32 %v779, %v839
        %v841 = vpop.f32.mrb[0].mxu0
        %v842 = vadd.f32 %v784, %v841
        %v843 = vpop.f32.mrb[0].mxu0
        %v844 = vadd.f32 %v784, %v843
        %845 = vmatprep.mubr.bf16.mxu0 0
        %846 = vmatmul.mubr.bf16.gmra.mrb[0].mxu0 %v801
        %v847 = vpop.f32.mrb[0].mxu0
        %v848 = vadd.f32 %v789, %v847
        %v849 = vpop.f32.mrb[0].mxu0
        %v850 = vadd.f32 %v789, %v849
        %v851 = vpop.f32.mrb[0].mxu0
        %v852 = vadd.f32 %v794, %v851
        %v853 = vpop.f32.mrb[0].mxu0
        %v854 = vadd.f32 %v794, %v853
        %855 = vdwg.mxu0
        %v856 = vmax.f32 %v838, 0.0
        %v857 = vmax.f32 %v840, 0.0
        %v858 = vmax.f32 %v842, 0.0
        %v859 = vmax.f32 %v844, 0.0
        %v860 = vmax.f32 %v848, 0.0
        %v861 = vmax.f32 %v850, 0.0
        %v862 = vmax.f32 %v852, 0.0
        %v863 = vmax.f32 %v854, 0.0
        %v864 = vadd.f32 %v856, %v722
        %v865 = vadd.f32 %v857, %v709
        %v866 = vadd.f32 %v858, %v723
        %v867 = vadd.f32 %v859, %v713
        %v868 = vadd.f32 %v860, %v724
        %v869 = vadd.f32 %v861, %v717
        %v870 = vadd.f32 %v862, %v725
        %v871 = vadd.f32 %v863, %v721
        %v872 = vld [vmem:[%s5] sm:$0xff]
        %v873 = vld [vmem:[%s5 + $0x8] sm:$0xff]
        %v874 = vld [vmem:[%s5 + $0x10] sm:$0xff]
        %v875 = vld [vmem:[%s5 + $0x18] sm:$0xff]
        %v876 = vld [vmem:[%s6] sm:$0xff]
        %v877 = vld [vmem:[%s6 + $0x8] sm:$0xff]
        %v878 = vld [vmem:[%s6 + $0x10] sm:$0xff]
        %v879 = vld [vmem:[%s6 + $0x18] sm:$0xff]
        %888 = vrot.lane.b32.xlu0 %v864, 124
        %v889 = vpop.permute.xlu0 %888
        %890 = vrot.lane.b32.xlu0 %v865, 124
        %v891 = vpop.permute.xlu0 %890
        %892 = vrot.lane.b32.xlu0 %v866, 124
        %v893 = vpop.permute.xlu0 %892
        %894 = vrot.lane.b32.xlu0 %v867, 124
        %v895 = vpop.permute.xlu0 %894
        %896 = vrot.lane.b32.xlu0 %v868, 124
        %v897 = vpop.permute.xlu0 %896
        %898 = vrot.lane.b32.xlu0 %v869, 124
        %v899 = vpop.permute.xlu0 %898
        %900 = vrot.lane.b32.xlu0 %v870, 124
        %v901 = vpop.permute.xlu0 %900
        %902 = vrot.lane.b32.xlu0 %v871, 124
        %v903 = vpop.permute.xlu0 %902
        %v904 = vsel %vm583, %v889, %v891
        %v905 = vsel %vm583, %v893, %v895
        %v906 = vsel %vm583, %v897, %v899
        %v907 = vsel %vm583, %v901, %v903
        %916 = vrot.lane.b32.xlu0 %v864, 120
        %v917 = vpop.permute.xlu0 %916
        %918 = vrot.lane.b32.xlu0 %v865, 120
        %v919 = vpop.permute.xlu0 %918
        %920 = vrot.lane.b32.xlu0 %v866, 120
        %v921 = vpop.permute.xlu0 %920
        %922 = vrot.lane.b32.xlu0 %v867, 120
        %v923 = vpop.permute.xlu0 %922
        %924 = vrot.lane.b32.xlu0 %v868, 120
        %v925 = vpop.permute.xlu0 %924
        %926 = vrot.lane.b32.xlu0 %v869, 120
        %v927 = vpop.permute.xlu0 %926
        %928 = vrot.lane.b32.xlu0 %v870, 120
        %v929 = vpop.permute.xlu0 %928
        %930 = vrot.lane.b32.xlu0 %v871, 120
        %v931 = vpop.permute.xlu0 %930
        %vm932 = vcmask 982016
        %v933 = vsel %vm932, %v917, %v919
        %v934 = vsel %vm932, %v921, %v923
        %v935 = vsel %vm932, %v925, %v927
        %v936 = vsel %vm932, %v929, %v931
        %v945 = vpack.c.bf16 %v866, %v864
        %v946 = vpack.c.bf16 %v867, %v865
        %v947 = vpack.c.bf16 %v870, %v868
        %v948 = vpack.c.bf16 %v871, %v869
        %v949 = vpack.c.bf16 %v905, %v904
        %v950 = vpack.c.bf16 %v895, %v891
        %v951 = vpack.c.bf16 %v907, %v906
        %v952 = vpack.c.bf16 %v903, %v899
        %v953 = vpack.c.bf16 %v934, %v933
        %v954 = vpack.c.bf16 %v923, %v919
        %v955 = vpack.c.bf16 %v936, %v935
        %v956 = vpack.c.bf16 %v931, %v927
        %v957 = vpack.c.bf16 %v873, %v872
        %v958 = vpack.c.bf16 %v875, %v874
        %960 = vset.pattern.permute.xlu0 0
        %961 = vperm.xlu0 %960, %v876
        %v962 = vpop.permute.xlu0 %961
        %965 = vset.pattern.permute.xlu0 0
        %966 = vperm.xlu0 %965, %v877
        %v967 = vpop.permute.xlu0 %966
        %970 = vset.pattern.permute.xlu0 0
        %971 = vperm.xlu0 %970, %v878
        %v972 = vpop.permute.xlu0 %971
        %975 = vset.pattern.permute.xlu0 0
        %976 = vperm.xlu0 %975, %v879
        %v977 = vpop.permute.xlu0 %976
        %v980 = vsel %vm796, %v957, 0
        %v983 = vsel %vm796, %v958, 0
        %985 = vmatprep.subr.bf16.mxu0 %v946
        %986 = vmatpush1.bf16.msra.mxu0 %v945
        %987 = vmatprep.subr.bf16.mxu0 %v948
        %988 = vmatpush1.bf16.msra.mxu0 %v947
        %989 = vmatprep.subr.bf16.mxu0 %v950
        %990 = vmatpush1.bf16.msra.mxu0 %v949
        %991 = vmatprep.subr.bf16.mxu0 %v952
        %992 = vmatpush1.bf16.msra.mxu0 %v951
        %993 = vmatprep.subr.bf16.mxu0 %v954
        %994 = vmatpush1.bf16.msra.mxu0 %v953
        %995 = vmatprep.subr.bf16.mxu0 %v956
        %996 = vmatpush1.bf16.msra.mxu0 %v955
        %997 = vmatprep.subr.bf16.mxu0 0
        %998 = vmatpush1.bf16.msra.mxu0 0
        %999 = vmatprep.subr.bf16.mxu0 0
        %1000 = vmatpush1.bf16.msra.mxu0 0
        %1001 = vmatprep.subr.bf16.mxu0 0
        %1002 = vmatpush1.bf16.msra.mxu0 0
        %1003 = vmatprep.subr.bf16.mxu0 0
        %1004 = vmatpush1.bf16.msra.mxu0 0
        %1005 = vmatprep.subr.bf16.mxu0 0
        %1006 = vmatpush1.bf16.msra.mxu0 0
        %1007 = vmatprep.subr.bf16.mxu0 0
        %1008 = vmatpush1.bf16.msra.mxu0 0
        %1009 = vmatprep.subr.bf16.mxu0 0
        %1010 = vmatpush1.bf16.msra.mxu0 0
        %1011 = vmatprep.subr.bf16.mxu0 0
        %1012 = vmatpush1.bf16.msra.mxu0 0
        %1013 = vmatprep.subr.bf16.mxu0 0
        %1014 = vmatpush1.bf16.msra.mxu0 0
        %1015 = vmatprep.subr.bf16.mxu0 0
        %1016 = vmatpush1.bf16.msra.mxu0 0
        %1017 = vmatprep.mubr.bf16.mxu0 0
        %1018 = vmatmul.mubr.bf16.gmra.mrb[0].mxu0 %v980
        %v1019 = vpop.f32.mrb[0].mxu0
        %v1020 = vadd.f32 %v962, %v1019
        %v1021 = vpop.f32.mrb[0].mxu0
        %v1022 = vadd.f32 %v962, %v1021
        %v1023 = vpop.f32.mrb[0].mxu0
        %v1024 = vadd.f32 %v967, %v1023
        %v1025 = vpop.f32.mrb[0].mxu0
        %v1026 = vadd.f32 %v967, %v1025
        %1027 = vmatprep.mubr.bf16.mxu0 0
        %1028 = vmatmul.mubr.bf16.gmra.mrb[0].mxu0 %v983
        %v1029 = vpop.f32.mrb[0].mxu0
        %v1030 = vadd.f32 %v972, %v1029
        %v1031 = vpop.f32.mrb[0].mxu0
        %v1032 = vadd.f32 %v972, %v1031
        %v1033 = vpop.f32.mrb[0].mxu0
        %v1034 = vadd.f32 %v977, %v1033
        %v1035 = vpop.f32.mrb[0].mxu0
        %v1036 = vadd.f32 %v977, %v1035
        %1037 = vdwg.mxu0
        %v1038 = vmax.f32 %v1020, 0.0
        %v1039 = vmax.f32 %v1022, 0.0
        %v1040 = vmax.f32 %v1024, 0.0
        %v1041 = vmax.f32 %v1026, 0.0
        %v1042 = vmax.f32 %v1030, 0.0
        %v1043 = vmax.f32 %v1032, 0.0
        %v1044 = vmax.f32 %v1034, 0.0
        %v1045 = vmax.f32 %v1036, 0.0
        %v1046 = vadd.f32 %v1038, %v904
        %v1047 = vadd.f32 %v1039, %v891
        %v1048 = vadd.f32 %v1040, %v905
        %v1049 = vadd.f32 %v1041, %v895
        %v1050 = vadd.f32 %v1042, %v906
        %v1051 = vadd.f32 %v1043, %v899
        %v1052 = vadd.f32 %v1044, %v907
        %v1053 = vadd.f32 %v1045, %v903
        %v1054 = vld [vmem:[%s7] sm:$0xff]
        %v1055 = vld [vmem:[%s7 + $0x8] sm:$0xff]
        %v1056 = vld [vmem:[%s7 + $0x10] sm:$0xff]
        %v1057 = vld [vmem:[%s7 + $0x18] sm:$0xff]
        %v1058 = vld [vmem:[%s8] sm:$0xff]
        %v1059 = vld [vmem:[%s8 + $0x8] sm:$0xff]
        %v1060 = vld [vmem:[%s8 + $0x10] sm:$0xff]
        %v1061 = vld [vmem:[%s8 + $0x18] sm:$0xff]
        %1070 = vrot.lane.b32.xlu0 %v1046, 120
        %v1071 = vpop.permute.xlu0 %1070
        %1072 = vrot.lane.b32.xlu0 %v1047, 120
        %v1073 = vpop.permute.xlu0 %1072
        %1074 = vrot.lane.b32.xlu0 %v1048, 120
        %v1075 = vpop.permute.xlu0 %1074
        %1076 = vrot.lane.b32.xlu0 %v1049, 120
        %v1077 = vpop.permute.xlu0 %1076
        %1078 = vrot.lane.b32.xlu0 %v1050, 120
        %v1079 = vpop.permute.xlu0 %1078
        %1080 = vrot.lane.b32.xlu0 %v1051, 120
        %v1081 = vpop.permute.xlu0 %1080
        %1082 = vrot.lane.b32.xlu0 %v1052, 120
        %v1083 = vpop.permute.xlu0 %1082
        %1084 = vrot.lane.b32.xlu0 %v1053, 120
        %v1085 = vpop.permute.xlu0 %1084
        %v1086 = vsel %vm932, %v1071, %v1073
        %v1087 = vsel %vm932, %v1075, %v1077
        %v1088 = vsel %vm932, %v1079, %v1081
        %v1089 = vsel %vm932, %v1083, %v1085
        %1094 = vrot.lane.b32.xlu0 %v1046, 112
        %v1095 = vpop.permute.xlu0 %1094
        %1096 = vrot.lane.b32.xlu0 %v1047, 112
        %v1097 = vpop.permute.xlu0 %1096
        %1098 = vrot.lane.b32.xlu0 %v1048, 112
        %v1099 = vpop.permute.xlu0 %1098
        %1100 = vrot.lane.b32.xlu0 %v1049, 112
        %v1101 = vpop.permute.xlu0 %1100
        %1102 = vrot.lane.b32.xlu0 %v1050, 112
        %v1103 = vpop.permute.xlu0 %1102
        %1104 = vrot.lane.b32.xlu0 %v1051, 112
        %v1105 = vpop.permute.xlu0 %1104
        %1106 = vrot.lane.b32.xlu0 %v1052, 112
        %v1107 = vpop.permute.xlu0 %1106
        %1108 = vrot.lane.b32.xlu0 %v1053, 112
        %v1109 = vpop.permute.xlu0 %1108
        %vm1110 = vcmask 916480
        %v1111 = vsel %vm1110, %v1095, %v1097
        %v1112 = vsel %vm1110, %v1099, %v1101
        %v1113 = vsel %vm1110, %v1103, %v1105
        %v1114 = vsel %vm1110, %v1107, %v1109
        %v1119 = vpack.c.bf16 %v1048, %v1046
        %v1120 = vpack.c.bf16 %v1052, %v1050
        %v1121 = vpack.c.bf16 %v1087, %v1086
        %v1122 = vpack.c.bf16 %v1089, %v1088
        %v1123 = vpack.c.bf16 %v1112, %v1111
        %v1124 = vpack.c.bf16 %v1114, %v1113
        %v1125 = vpack.c.bf16 %v1055, %v1054
        %v1126 = vpack.c.bf16 %v1057, %v1056
        %1128 = vset.pattern.permute.xlu0 0
        %1129 = vperm.xlu0 %1128, %v1058
        %v1130 = vpop.permute.xlu0 %1129
        %1133 = vset.pattern.permute.xlu0 0
        %1134 = vperm.xlu0 %1133, %v1059
        %v1135 = vpop.permute.xlu0 %1134
        %1138 = vset.pattern.permute.xlu0 0
        %1139 = vperm.xlu0 %1138, %v1060
        %v1140 = vpop.permute.xlu0 %1139
        %1143 = vset.pattern.permute.xlu0 0
        %1144 = vperm.xlu0 %1143, %v1061
        %v1145 = vpop.permute.xlu0 %1144
        %v1148 = vsel %vm796, %v1125, 0
        %v1151 = vsel %vm796, %v1126, 0
        %1153 = vmatprep.subr.bf16.mxu0 0
        %1154 = vmatpush1.bf16.msra.mxu0 %v1119
        %1155 = vmatprep.subr.bf16.mxu0 0
        %1156 = vmatpush1.bf16.msra.mxu0 %v1120
        %1157 = vmatprep.subr.bf16.mxu0 0
        %1158 = vmatpush1.bf16.msra.mxu0 %v1121
        %1159 = vmatprep.subr.bf16.mxu0 0
        %1160 = vmatpush1.bf16.msra.mxu0 %v1122
        %1161 = vmatprep.subr.bf16.mxu0 0
        %1162 = vmatpush1.bf16.msra.mxu0 %v1123
        %1163 = vmatprep.subr.bf16.mxu0 0
        %1164 = vmatpush1.bf16.msra.mxu0 %v1124
        %1165 = vmatprep.subr.bf16.mxu0 0
        %1166 = vmatpush1.bf16.msra.mxu0 0
        %1167 = vmatprep.subr.bf16.mxu0 0
        %1168 = vmatpush1.bf16.msra.mxu0 0
        %1169 = vmatprep.subr.bf16.mxu0 0
        %1170 = vmatpush1.bf16.msra.mxu0 0
        %1171 = vmatprep.subr.bf16.mxu0 0
        %1172 = vmatpush1.bf16.msra.mxu0 0
        %1173 = vmatprep.subr.bf16.mxu0 0
        %1174 = vmatpush1.bf16.msra.mxu0 0
        %1175 = vmatprep.subr.bf16.mxu0 0
        %1176 = vmatpush1.bf16.msra.mxu0 0
        %1177 = vmatprep.subr.bf16.mxu0 0
        %1178 = vmatpush1.bf16.msra.mxu0 0
        %1179 = vmatprep.subr.bf16.mxu0 0
        %1180 = vmatpush1.bf16.msra.mxu0 0
        %1181 = vmatprep.subr.bf16.mxu0 0
        %1182 = vmatpush1.bf16.msra.mxu0 0
        %1183 = vmatprep.subr.bf16.mxu0 0
        %1184 = vmatpush1.bf16.msra.mxu0 0
        %1185 = vmatprep.mubr.bf16.mxu0 0
        %1186 = vmatmul.mubr.bf16.gmra.mrb[0].mxu0 %v1148
        %v1187 = vpop.f32.mrb[0].mxu0
        %v1188 = vadd.f32 %v1130, %v1187
        %v1189 = vpop.f32.mrb[0].mxu0
        %v1190 = vpop.f32.mrb[0].mxu0
        %v1191 = vadd.f32 %v1135, %v1190
        %v1192 = vpop.f32.mrb[0].mxu0
        %1193 = vmatprep.mubr.bf16.mxu0 0
        %1194 = vmatmul.mubr.bf16.gmra.mrb[0].mxu0 %v1151
        %v1195 = vpop.f32.mrb[0].mxu0
        %v1196 = vadd.f32 %v1140, %v1195
        %v1197 = vpop.f32.mrb[0].mxu0
        %v1198 = vpop.f32.mrb[0].mxu0
        %v1199 = vadd.f32 %v1145, %v1198
        %v1200 = vpop.f32.mrb[0].mxu0
        %1201 = vdwg.mxu0
        %v1202 = vmax.f32 %v1188, 0.0
        %v1203 = vmax.f32 %v1191, 0.0
        %v1204 = vmax.f32 %v1196, 0.0
        %v1205 = vmax.f32 %v1199, 0.0
        %v1206 = vadd.f32 %v1202, %v1086
        %v1207 = vadd.f32 %v1203, %v1087
        %v1208 = vadd.f32 %v1204, %v1088
        %v1209 = vadd.f32 %v1205, %v1089
        %1210 = vst [vmem:[%s491] sm:$0xff] %v1206
        %1211 = vst [vmem:[%s491 + $0x8] sm:$0xff] %v1207
        %1212 = vst [vmem:[%s491 + $0x10] sm:$0xff] %v1208
        %1213 = vst [vmem:[%s491 + $0x18] sm:$0xff] %v1209
        %v1214 = vadd.f32 %v1206, %v1207
        %v1215 = vadd.f32 %v1214, %v1208
        %v1216 = vadd.f32 %v1215, %v1209
        %v1217 = vrot.slane %v1216, 4
        %v1218 = vadd.f32 %v1216, %v1217
        %v1219 = vrot.slane %v1218, 2
        %v1220 = vadd.f32 %v1218, %v1219
        %v1221 = vrot.slane %v1220, 1
        %v1222 = vadd.f32 %v1220, %v1221
        %v1223 = vrcp.pop 32.0
        %v1224 = vmul.f32 %v1222, %v1223
        %v1225 = vpack.c.bf16 %v1224, %v1224
        %v1226 = vld [vmem:[%s9] sm:$0xff]
        %v1227 = vld [vmem:[%s9 + $0x8] sm:$0xff]
        %v1228 = vld [vmem:[%s9 + $0x10] sm:$0xff]
        %v1229 = vld [vmem:[%s9 + $0x18] sm:$0xff]
        %v1230 = vld [vmem:[%s9 + $0x20] sm:$0xff]
        %v1231 = vld [vmem:[%s9 + $0x28] sm:$0xff]
        %v1232 = vld [vmem:[%s9 + $0x30] sm:$0xff]
        %v1233 = vld [vmem:[%s9 + $0x38] sm:$0xff]
        %v1234 = vld [vmem:[%s9 + $0x40] sm:$0xff]
        %v1235 = vld [vmem:[%s9 + $0x48] sm:$0xff]
        %v1236 = vld [vmem:[%s9 + $0x50] sm:$0xff]
        %v1237 = vld [vmem:[%s9 + $0x58] sm:$0xff]
        %v1238 = vld [vmem:[%s9 + $0x60] sm:$0xff]
        %v1239 = vld [vmem:[%s9 + $0x68] sm:$0xff]
        %v1240 = vld [vmem:[%s9 + $0x70] sm:$0xff]
        %v1241 = vld [vmem:[%s9 + $0x78] sm:$0xff]
        %v1242 = vld [vmem:[%s9 + $0x80] sm:$0xff]
        %v1243 = vld [vmem:[%s9 + $0x88] sm:$0xff]
        %v1244 = vld [vmem:[%s9 + $0x90] sm:$0xff]
        %v1245 = vld [vmem:[%s9 + $0x98] sm:$0xff]
        %v1246 = vld [vmem:[%s9 + $0xa0] sm:$0xff]
        %v1247 = vld [vmem:[%s9 + $0xa8] sm:$0xff]
        %v1248 = vld [vmem:[%s9 + $0xb0] sm:$0xff]
        %v1249 = vld [vmem:[%s9 + $0xb8] sm:$0xff]
        %v1250 = vld [vmem:[%s9 + $0xc0] sm:$0xff]
        %v1251 = vld [vmem:[%s9 + $0xc8] sm:$0xff]
        %v1252 = vld [vmem:[%s9 + $0xd0] sm:$0xff]
        %v1253 = vld [vmem:[%s9 + $0xd8] sm:$0xff]
        %v1254 = vld [vmem:[%s9 + $0xe0] sm:$0xff]
        %v1255 = vld [vmem:[%s9 + $0xe8] sm:$0xff]
        %v1256 = vld [vmem:[%s9 + $0xf0] sm:$0xff]
        %v1257 = vld [vmem:[%s9 + $0xf8] sm:$0xff]
        %v1258 = vpack.c.bf16 %v1228, %v1226
        %v1259 = vpack.c.bf16 %v1229, %v1227
        %v1260 = vpack.c.bf16 %v1232, %v1230
        %v1261 = vpack.c.bf16 %v1233, %v1231
        %v1262 = vpack.c.bf16 %v1236, %v1234
        %v1263 = vpack.c.bf16 %v1237, %v1235
        %v1264 = vpack.c.bf16 %v1240, %v1238
        %v1265 = vpack.c.bf16 %v1241, %v1239
        %v1266 = vpack.c.bf16 %v1244, %v1242
        %v1267 = vpack.c.bf16 %v1245, %v1243
        %v1268 = vpack.c.bf16 %v1248, %v1246
        %v1269 = vpack.c.bf16 %v1249, %v1247
        %v1270 = vpack.c.bf16 %v1252, %v1250
        %v1271 = vpack.c.bf16 %v1253, %v1251
        %v1272 = vpack.c.bf16 %v1256, %v1254
        %v1273 = vpack.c.bf16 %v1257, %v1255
        %v1274 = vld [vmem:[%s10] sm:$0x3]
        %v1276 = vlaneseq
        %v1277 = vshrl.u32 %v1276, 7
        %v1278 = vsub.s32 0, %v1277
        %v1279 = vrot.slane %v1274, %v1278
        %v1280 = vlaneseq
        %v1281 = vshrl.u32 %v1280, 7
        %v1282 = vsub.s32 1, %v1281
        %v1283 = vrot.slane %v1274, %v1282
        %1286 = vmatprep.subr.bf16.mxu0 %v1259
        %1287 = vmatpush1.bf16.msra.mxu0 %v1258
        %1288 = vmatprep.subr.bf16.mxu0 %v1261
        %1289 = vmatpush1.bf16.msra.mxu0 %v1260
        %1290 = vmatprep.subr.bf16.mxu0 %v1263
        %1291 = vmatpush1.bf16.msra.mxu0 %v1262
        %1292 = vmatprep.subr.bf16.mxu0 %v1265
        %1293 = vmatpush1.bf16.msra.mxu0 %v1264
        %1294 = vmatprep.subr.bf16.mxu0 %v1267
        %1295 = vmatpush1.bf16.msra.mxu0 %v1266
        %1296 = vmatprep.subr.bf16.mxu0 %v1269
        %1297 = vmatpush1.bf16.msra.mxu0 %v1268
        %1298 = vmatprep.subr.bf16.mxu0 %v1271
        %1299 = vmatpush1.bf16.msra.mxu0 %v1270
        %1300 = vmatprep.subr.bf16.mxu0 %v1273
        %1301 = vmatpush1.bf16.msra.mxu0 %v1272
        %1302 = vmatprep.subr.bf16.mxu0 0
        %1303 = vmatpush1.bf16.msra.mxu0 0
        %1304 = vmatprep.subr.bf16.mxu0 0
        %1305 = vmatpush1.bf16.msra.mxu0 0
        %1306 = vmatprep.subr.bf16.mxu0 0
        %1307 = vmatpush1.bf16.msra.mxu0 0
        %1308 = vmatprep.subr.bf16.mxu0 0
        %1309 = vmatpush1.bf16.msra.mxu0 0
        %1310 = vmatprep.subr.bf16.mxu0 0
        %1311 = vmatpush1.bf16.msra.mxu0 0
        %1312 = vmatprep.subr.bf16.mxu0 0
        %1313 = vmatpush1.bf16.msra.mxu0 0
        %1314 = vmatprep.subr.bf16.mxu0 0
        %1315 = vmatpush1.bf16.msra.mxu0 0
        %1316 = vmatprep.subr.bf16.mxu0 0
        %1317 = vmatpush1.bf16.msra.mxu0 0
        %1318 = vmatprep.mubr.bf16.mxu0 0
        %1319 = vmatmul.mubr.bf16.gmra.mrb[0].mxu0 %v1225
        %v1320 = vpop.f32.mrb[0].mxu0
        %v1321 = vadd.f32 %v1279, %v1320
        %v1322 = vpop.f32.mrb[0].mxu0
        %v1323 = vadd.f32 %v1283, %v1322
        %v1324 = vpop.f32.mrb[0].mxu0
        %v1325 = vpop.f32.mrb[0].mxu0
        %1326 = vdwg.mxu0
        %v1329 = vcombine.low %v1321, %v1323
        %v1331 = vunpack.c.l.s4 1966171168
        %v1332 = vunpack.c.0.s8 %v1331
        %v1333 = vlaneseq
        %v1334 = vshrl.u32 %v1333, 7
        %v1335 = vsub.s32 %v1332, %v1334
        %v1336 = vrot.slane %v1329, %v1335
        %v1338 = vunpack.c.l.s4 1966171168
        %v1339 = vunpack.c.0.s8 %v1338
        %v1340 = vlaneseq
        %v1341 = vshrl.u32 %v1340, 7
        %v1342 = vsub.s32 %v1339, %v1341
        %v1343 = vrot.slane %v1336, %v1342
        %v1345 = vlaneseq
        %vm1346 = vcmp.ge.s32.totalorder %v1345, 0
        %vm1347 = vcmp.lt.s32.totalorder %v1345, 256
        %vm1348 = vmand %vm1346, %vm1347
        %1349 = vst.msk [vmem:[%s512] sm:$0x3] %vm1348, %v1343
        %1350 = vadd.xlane.f32.xlu0 %v1206
        %v1351 = vpop.xlane.xlu0 %1350
        %1352 = vadd.xlane.f32.xlu0 %v1207
        %v1353 = vpop.xlane.xlu0 %1352
        %1354 = vadd.xlane.f32.xlu0 %v1208
        %v1355 = vpop.xlane.xlu0 %1354
        %1356 = vadd.xlane.f32.xlu0 %v1209
        %v1357 = vpop.xlane.xlu0 %1356
        %v1358 = vrcp.pop 128.0
        %v1359 = vmul.f32 %v1351, %v1358
        %v1360 = vmul.f32 %v1353, %v1358
        %v1361 = vmul.f32 %v1355, %v1358
        %v1362 = vmul.f32 %v1357, %v1358
        %v1363 = vld [vmem:[%s11] sm:$0xff]
        %v1364 = vld [vmem:[%s11 + $0x8] sm:$0xff]
        %v1365 = vld [vmem:[%s11 + $0x10] sm:$0xff]
        %v1366 = vld [vmem:[%s11 + $0x18] sm:$0xff]
        %v1367 = vmul.f32 %v1363, %v1359
        %v1368 = vmul.f32 %v1364, %v1360
        %v1369 = vmul.f32 %v1365, %v1361
        %v1370 = vmul.f32 %v1366, %v1362
        %vm1371 = vcmask 31744
        %v1372 = vsel %vm1371, %v1367, 0.0
        %v1373 = vsel %vm1371, %v1368, 0.0
        %v1374 = vadd.f32 %v1372, %v1373
        %v1375 = vsel %vm1371, %v1369, 0.0
        %v1376 = vadd.f32 %v1374, %v1375
        %v1377 = vsel %vm1371, %v1370, 0.0
        %v1378 = vadd.f32 %v1376, %v1377
        %v1379 = vrot.slane %v1378, 4
        %v1380 = vadd.f32 %v1378, %v1379
        %v1381 = vrot.slane %v1380, 2
        %v1382 = vadd.f32 %v1380, %v1381
        %v1383 = vrot.slane %v1382, 1
        %v1384 = vadd.f32 %v1382, %v1383
        %v1385 = vld [vmem:[%s12] sm:$0x1]
        %v1386 = vadd.f32 %v1384, %v1385
        %vm1387 = vcmask 24576
        %1388 = vst.msk [vmem:[%s503] sm:$0x1] %vm1387, %v1386
        %s1389 = sand.u32 %s319, 1
        %s1390 = scalar_lea.sflag [#allocation3], %s1389
        %s1391 = sand.u32 %s319, 1
        %s1392 = smul.addr %s1391, 32
        %s1393 = scalar_lea.vmem [#allocation2], %s1392
        %p1394 = scmp.lt.s32.totalorder %s33, 1
        %s1395 = scalar_select %p1394, %s33, 1
        %s1396 = smul.addr %s1395, 2
        %s1397 = scalar_lea.vmem %s14, %s1396
        %s1398 = sand.u32 %s371, 1
        %s1399 = scalar_lea.sflag [#allocation5], %s1398
        %s1400 = sand.u32 %s371, 1
        %s1401 = scalar_lea.vmem [#allocation4], %s1400
        // Predicated region
        $region73: #{catac_forward.1} parent=71 // pred_check
          %p1402 = pneg %p329
        $region74: #{catac_forward.1} parent=71 // pred_check_branch
          %1404 = sbr.rel (%p1402) target = $region76
        $region75: #{catac_forward.1} parent=71 // pred_region
          %s1406 = ssub.s32 512, 512
          %1407 = vsyncadd %s1390, %s1406
          %s1408 = smul.addr %s33, 4
          %s1409 = smul.addr %s1408, 128
          %s1410 = scalar_lea.hbm %s13, %s1409
          %s1411 = sshll.u32 %s1393, 4
          %s1412 = int_to_ptr.vmem [resolvable:$true] %s1411
          %1417 = dma.vmem_to_hbm [thread:$0]  %s1412, 512, %s1410, %s1390, 128, 128, 8
        $region76: #{catac_forward.1} parent=71 // pred_fallthru
          _
        // Predicated region
        $region77: #{catac_forward.1} parent=71 // pred_check
          %p1418 = pneg %p355
        $region78: #{catac_forward.1} parent=71 // pred_check_branch
          %1420 = sbr.rel (%p1418) target = $region80
        $region79: #{catac_forward.1} parent=71 // pred_region
          _
        $region80: #{catac_forward.1} parent=71 // pred_fallthru
          _
        // Predicated region
        $region81: #{catac_forward.1} parent=71 // pred_check
          %p1421 = pneg %p381
        $region82: #{catac_forward.1} parent=71 // pred_check_branch
          %1423 = sbr.rel (%p1421) target = $region84
        $region83: #{catac_forward.1} parent=71 // pred_region
          %s1425 = ssub.s32 16, 16
          %1426 = vsyncadd %s1399, %s1425
          %s1427 = smul.addr %s33, 16
          %s1428 = scalar_lea.hbm %s15, %s1427
          %s1430 = sshll.u32 %s1401, 4
          %s1431 = int_to_ptr.vmem [resolvable:$true] %s1430
          %1433 = dma.vmem_to_hbm [thread:$0]  %s1431, 16, %s1428, %s1399
        $region84: #{catac_forward.1} parent=71 // pred_fallthru
          _
      $region72: #{catac_forward.1} parent=5 // pred_fallthru
        _
      %p1434 = scmp.le.s32.totalorder 2, %s28
      // Predicated region
      $region85: #{catac_forward.1} parent=5 // pred_check
        %p1435 = pneg %p1434
      $region86: #{catac_forward.1} parent=5 // pred_check_branch
        %1437 = sbr.rel (%p1435) target = $region88
      $region87: #{catac_forward.1} parent=5 // pred_region
        %s1438 = ssub.s32 %s28, 2
        // Predicated region
        $region89: #{catac_forward.1} parent=87 // pred_check
          %p1439 = pneg %p335
        $region90: #{catac_forward.1} parent=87 // pred_check_branch
          %1441 = sbr.rel (%p1439) target = $region92
        $region91: #{catac_forward.1} parent=87 // pred_region
          %s1442 = sand.u32 %s320, 1
          %s1443 = scalar_lea.sflag [#allocation3], %s1442
          %s1444 = sand.u32 %s320, 1
          %s1445 = smul.addr %s1444, 32
          %s1446 = scalar_lea.vmem [#allocation2], %s1445
          %1447 = dma.done %s1443, 512
        $region92: #{catac_forward.1} parent=87 // pred_fallthru
          _
        // Predicated region
        $region93: #{catac_forward.1} parent=87 // pred_check
          %p1448 = pneg %p361
        $region94: #{catac_forward.1} parent=87 // pred_check_branch
          %1450 = sbr.rel (%p1448) target = $region96
        $region95: #{catac_forward.1} parent=87 // pred_region
          %p1451 = scmp.lt.s32.totalorder %s34, 1
          %s1452 = scalar_select %p1451, %s34, 1
          %s1453 = smul.addr %s1452, 2
          %s1454 = scalar_lea.vmem %s14, %s1453
        $region96: #{catac_forward.1} parent=87 // pred_fallthru
          _
        // Predicated region
        $region97: #{catac_forward.1} parent=87 // pred_check
          %p1455 = pneg %p387
        $region98: #{catac_forward.1} parent=87 // pred_check_branch
          %1457 = sbr.rel (%p1455) target = $region100
        $region99: #{catac_forward.1} parent=87 // pred_region
          %s1458 = sand.u32 %s372, 1
          %s1459 = scalar_lea.sflag [#allocation5], %s1458
          %s1460 = sand.u32 %s372, 1
          %s1461 = scalar_lea.vmem [#allocation4], %s1460
          %1462 = dma.done %s1459, 16
        $region100: #{catac_forward.1} parent=87 // pred_fallthru
          _
      $region88: #{catac_forward.1} parent=5 // pred_fallthru
        _
    $region6: #{catac_forward.1} parent=1 // loop_footer
      %s32 = sadd.s32 1, %s28
    $region7: #{catac_forward.1} parent=1 // loop_footer_branch
      %27 = sbr.rel target = $region3
    $region8: #{catac_forward.1} parent=1 // loop_exit
      _
    %1463 = vsyncpa [#allocation3], 1
    %s1464 = scalar_lea.sflag [#allocation3], 1
    %1465 = vsyncpa %s1464, 1
    %1466 = vsyncpa [#allocation5], 1
    %s1467 = scalar_lea.sflag [#allocation5], 1
    %1468 = vsyncpa %s1467, 1

</llo_original>
